<compile_context>
chip_gen: v6e
topology: v6e:2x2x1
jax: 0.10.0
libtpu: 0.0.40
codegen_flags: <defaults>
</compile_context>

<pallas_src>
import functools
import math

import jax
import jax.numpy as jnp
from jax.experimental import pallas as pl
from jax.experimental.pallas import tpu as pltpu

EPS = 1e-6  # LayerNormalization eps


# ---------------------------------------------------------------------------
# In-kernel helpers
# ---------------------------------------------------------------------------
def _layernorm(x, gamma, beta):
    # Annotated-Transformer LayerNormalization:
    #   a_2 * (x - mean) / (std + eps) + b_2, std unbiased (torch .std default)
    mean = jnp.mean(x, axis=-1, keepdims=True)
    d = x - mean
    var = jnp.sum(d * d, axis=-1, keepdims=True) * (1.0 / (x.shape[-1] - 1))
    inv = pl.reciprocal(jnp.sqrt(var) + EPS, approx=True)   # EUP, frees VALU
    return gamma * (d * inv) + beta


# ---------------------------------------------------------------------------
# Fused full-encoder kernel: grid = (batch, layer)
# ---------------------------------------------------------------------------
def fused_encoder_kernel(n_heads, d_head,
                         x_ref, mask_ref,
                         g1_ref, b1_ref, wqkv_ref, bqkv_ref, wo_ref, bo_ref,
                         g2_ref, b2_ref, w1_ref, bf1_ref, w2_ref, bf2_ref,
                         gf_ref, bf_ref,
                         o_ref,
                         x_sc, ctx_sc):
    l = pl.program_id(1)
    n_layers = pl.num_programs(1)
    D = x_sc.shape[-1]

    # First layer of this batch element: load activations into resident VMEM.
    @pl.when(l == 0)
    def _():
        x_sc[...] = x_ref[0].astype(jnp.float32)

    x = x_sc[...]                     # (S, D) f32, resident across layers
    m = mask_ref[0]                   # (1, S); 0.0 == padded position

    # ---- sublayer 1: pre-norm multi-head self-attention + residual --------
    n1 = _layernorm(x, g1_ref[0], b1_ref[0]).astype(jnp.bfloat16)
    # Fused Q|K|V projection: one (S,D)@(D,3D) matmul, f32 accumulation.
    qkv = jnp.dot(n1, wqkv_ref[0],
                  preferred_element_type=jnp.float32) + bqkv_ref[0]   # (S, 3D)
    q = qkv[:, 0 * D:1 * D]
    k = qkv[:, 1 * D:2 * D]
    v = qkv[:, 2 * D:3 * D]

    scale = 1.0 / math.sqrt(d_head)
    for h in range(n_heads):          # static unroll over heads
        sl = slice(h * d_head, (h + 1) * d_head)
        qh = q[:, sl].astype(jnp.bfloat16)
        kh = k[:, sl].astype(jnp.bfloat16)
        vh = v[:, sl].astype(jnp.bfloat16)
        # logits / softmax kept in f32
        s = jnp.dot(qh, kh.T, preferred_element_type=jnp.float32) * scale  # (S,S)
        s = jnp.where(m == 0.0, jnp.float32(-1e9), s)
        s = s - jnp.max(s, axis=-1, keepdims=True)
        p = jnp.exp(s)
        p = p * pl.reciprocal(jnp.sum(p, axis=-1, keepdims=True), approx=True)
        # write this head's context into the (S, D) slab
        ctx_sc[:, sl] = jnp.dot(p.astype(jnp.bfloat16), vh,
                                preferred_element_type=jnp.float32)
    # One full-depth output projection: (S,D)@(D,D)
    attn = jnp.dot(ctx_sc[...].astype(jnp.bfloat16), wo_ref[0],
                   preferred_element_type=jnp.float32) + bo_ref[0]
    x = x + attn                      # residual (dropout == identity)

    # ---- sublayer 2: pre-norm position-wise feed-forward + residual -------
    n2 = _layernorm(x, g2_ref[0], b2_ref[0]).astype(jnp.bfloat16)
    h1 = jnp.maximum(
        jnp.dot(n2, w1_ref[0], preferred_element_type=jnp.float32) + bf1_ref[0],
        0.0)
    ff = jnp.dot(h1.astype(jnp.bfloat16), w2_ref[0],
                 preferred_element_type=jnp.float32) + bf2_ref[0]
    x = x + ff

    x_sc[...] = x                     # keep resident for next layer

    # Last layer: apply the Encoder's final LayerNormalization and emit.
    @pl.when(l == n_layers - 1)
    def _():
        o_ref[0] = _layernorm(x, gf_ref[...], bf_ref[...]).astype(o_ref.dtype)


# ---------------------------------------------------------------------------
# Encoder.forward wrapper (single fused pallas_call)
# ---------------------------------------------------------------------------
def encoder_forward(src, mask, params, g_final, b_final, n_heads):
    B, S, D = src.shape
    L = params["wqkv"].shape[0]
    dff = params["w1"].shape[-1]
    d_head = D // n_heads

    def per_batch(*tail):
        nt = len(tail)
        return pl.BlockSpec((1,) + tail, lambda b, l, _n=nt: (b,) + (0,) * _n)

    def per_layer(*tail):
        nt = len(tail)
        return pl.BlockSpec((1,) + tail, lambda b, l, _n=nt: (l,) + (0,) * _n)

    def fixed(*shape):
        n = len(shape)
        return pl.BlockSpec(shape, lambda b, l, _n=n: (0,) * _n)

    in_specs = [
        per_batch(S, D),                            # src
        per_batch(1, S),                            # mask
        per_layer(1, D), per_layer(1, D),           # g1, b1
        per_layer(D, 3 * D), per_layer(1, 3 * D),   # wqkv, bqkv
        per_layer(D, D), per_layer(1, D),           # wo, bo
        per_layer(1, D), per_layer(1, D),           # g2, b2
        per_layer(D, dff), per_layer(1, dff),       # w1, bf1
        per_layer(dff, D), per_layer(1, D),         # w2, bf2
        fixed(1, D), fixed(1, D),                   # final LN gamma, beta
    ]

    # Rough VMEM budget: double-buffered per-layer weights + resident
    # activations / scores, with headroom; clamped to a v7x-safe ceiling.
    w_layer = (D * 3 * D + D * D + D * dff + dff * D) * 2 \
              + (3 * D + 9 * D + dff) * 4
    act = (10 * S * D + 3 * S * D + 2 * S * S + S * dff) * 4
    vmem_limit = int(min(max(4 * w_layer + act + (2 << 20), 16 << 20), 48 << 20))

    return pl.pallas_call(
        functools.partial(fused_encoder_kernel, n_heads, d_head),
        out_shape=jax.ShapeDtypeStruct((B, S, D), src.dtype),
        grid_spec=pltpu.PrefetchScalarGridSpec(
            num_scalar_prefetch=0,
            grid=(B, L),
            in_specs=in_specs,
            out_specs=pl.BlockSpec((1, S, D), lambda b, l: (b, 0, 0)),
            scratch_shapes=[pltpu.VMEM((S, D), jnp.float32),   # resident x
                            pltpu.VMEM((S, D), jnp.float32)],  # head-output slab
        ),
        compiler_params=pltpu.CompilerParams(
            dimension_semantics=("parallel", "arbitrary"),
            vmem_limit_bytes=vmem_limit),
    )(src, mask,
      params["g1"], params["b1"], params["wqkv"], params["bqkv"],
      params["wo"], params["bo"], params["g2"], params["b2"],
      params["w1"], params["bf1"], params["w2"], params["bf2"],
      g_final, b_final)


# ---------------------------------------------------------------------------
# Deterministic parameter initialization (synthetic weights, stacked by layer)
# ---------------------------------------------------------------------------
def init_params(key, n_layers, d_model, d_ff):
    names = ("g1", "b1", "wqkv", "bqkv", "wo", "bo",
             "g2", "b2", "w1", "bf1", "w2", "bf2")
    p = {n: [] for n in names}

    def lin(k, fi, fo):
        w = jax.random.normal(k, (fi, fo), jnp.float32) * (1.0 / math.sqrt(fi))
        return w.astype(jnp.bfloat16)          # matmul weights stored bf16

    for _ in range(n_layers):
        key, *ks = jax.random.split(key, 7)
        wq = lin(ks[0], d_model, d_model)
        wk = lin(ks[1], d_model, d_model)
        wv = lin(ks[2], d_model, d_model)
        p["g1"].append(jnp.ones((1, d_model), jnp.float32))
        p["b1"].append(jnp.zeros((1, d_model), jnp.float32))
        p["wqkv"].append(jnp.concatenate([wq, wk, wv], axis=1))   # (D, 3D) bf16
        p["bqkv"].append(jnp.zeros((1, 3 * d_model), jnp.float32))
        p["wo"].append(lin(ks[3], d_model, d_model))
        p["bo"].append(jnp.zeros((1, d_model), jnp.float32))
        p["g2"].append(jnp.ones((1, d_model), jnp.float32))
        p["b2"].append(jnp.zeros((1, d_model), jnp.float32))
        p["w1"].append(lin(ks[4], d_model, d_ff))
        p["bf1"].append(jnp.zeros((1, d_ff), jnp.float32))
        p["w2"].append(lin(ks[5], d_ff, d_model))
        p["bf2"].append(jnp.zeros((1, d_model), jnp.float32))
    return {k: jnp.stack(v, axis=0) for k, v in p.items()}


# ---------------------------------------------------------------------------
# Pure-JAX reference (mirrors the kernel's bf16-operand / f32-accum math)
# ---------------------------------------------------------------------------
def ref_layernorm(x, g, b):
    mean = jnp.mean(x, axis=-1, keepdims=True)
    d = x - mean
    var = jnp.sum(d * d, axis=-1, keepdims=True) / (x.shape[-1] - 1)
    return g * d / (jnp.sqrt(var) + EPS) + b


def ref_encoder(src, mask, params, fg, fb, n_heads):
    B, S, D = src.shape
    dh = D // n_heads
    L = params["wqkv"].shape[0]
    bf16, f32 = jnp.bfloat16, jnp.float32
    x = src
    for l in range(L):
        n1 = ref_layernorm(x, params["g1"][l], params["b1"][l]).astype(bf16)
        qkv = jnp.einsum("bsd,de->bse", n1, params["wqkv"][l],
                         preferred_element_type=f32) + params["bqkv"][l]
        q, k, v = qkv[..., :D], qkv[..., D:2 * D], qkv[..., 2 * D:]
        qh = q.reshape(B, S, n_heads, dh).transpose(0, 2, 1, 3).astype(bf16)
        kh = k.reshape(B, S, n_heads, dh).transpose(0, 2, 1, 3).astype(bf16)
        vh = v.reshape(B, S, n_heads, dh).transpose(0, 2, 1, 3).astype(bf16)
        s = jnp.einsum("bhqd,bhkd->bhqk", qh, kh,
                       preferred_element_type=f32) / math.sqrt(dh)
        s = jnp.where(mask[:, None, :, :] == 0.0, -1e9, s)
        p = jax.nn.softmax(s, axis=-1)
        ctx = jnp.einsum("bhqk,bhkd->bhqd", p.astype(bf16), vh,
                         preferred_element_type=f32)
        ctx = ctx.transpose(0, 2, 1, 3).reshape(B, S, D)
        attn = jnp.einsum("bsd,de->bse", ctx.astype(bf16), params["wo"][l],
                          preferred_element_type=f32) + params["bo"][l]
        x = x + attn
        n2 = ref_layernorm(x, params["g2"][l], params["b2"][l]).astype(bf16)
        h1 = jax.nn.relu(jnp.einsum("bsd,df->bsf", n2, params["w1"][l],
                                    preferred_element_type=f32) + params["bf1"][l])
        ff = jnp.einsum("bsf,fd->bsd", h1.astype(bf16), params["w2"][l],
                        preferred_element_type=f32) + params["bf2"][l]
        x = x + ff
    return ref_layernorm(x, fg, fb)


# ---------------------------------------------------------------------------
if __name__ == "__main__":
    B, S, D, H, DFF, N_LAYERS = 2, 8, 32, 4, 64, 2

    key = jax.random.PRNGKey(0)
    key, kx = jax.random.split(key)
    src = jax.random.normal(kx, (B, S, D), jnp.float32)

    # mask: 1.0 = real token, 0.0 = padding (hidden). Batch 1 has 3 padded slots.
    mask = jnp.ones((B, 1, S), jnp.float32)
    mask = mask.at[1, 0, S - 3:].set(0.0)

    key, kp = jax.random.split(key)
    params = init_params(kp, N_LAYERS, D, DFF)
    g_final = jnp.ones((1, D), jnp.float32)
    b_final = jnp.zeros((1, D), jnp.float32)

    out = encoder_forward(src, mask, params, g_final, b_final, H)
    out = jax.block_until_ready(out)

    ref = ref_encoder(src, mask, params, g_final, b_final, H)
    assert out.shape == (B, S, D)
    assert bool(jnp.all(jnp.isfinite(out)))
    max_err = float(jnp.max(jnp.abs(out - ref)))
    assert bool(jnp.allclose(out, ref, atol=3e-2, rtol=3e-2)), max_err

    print("KERNEL_OK")
</pallas_src>

<mosaic_0001>
module attributes {stable_mosaic.version = 11 : i64} {
  func.func @fused_encoder_kernel(%arg0: i32, %arg1: i32, %arg2: memref<1x8x32xf32, #tpu.memory_space<vmem>>, %arg3: memref<1x1x8xf32, #tpu.memory_space<vmem>>, %arg4: memref<1x1x32xf32, #tpu.memory_space<vmem>>, %arg5: memref<1x1x32xf32, #tpu.memory_space<vmem>>, %arg6: memref<1x32x96xbf16, #tpu.memory_space<vmem>>, %arg7: memref<1x1x96xf32, #tpu.memory_space<vmem>>, %arg8: memref<1x32x32xbf16, #tpu.memory_space<vmem>>, %arg9: memref<1x1x32xf32, #tpu.memory_space<vmem>>, %arg10: memref<1x1x32xf32, #tpu.memory_space<vmem>>, %arg11: memref<1x1x32xf32, #tpu.memory_space<vmem>>, %arg12: memref<1x32x64xbf16, #tpu.memory_space<vmem>>, %arg13: memref<1x1x64xf32, #tpu.memory_space<vmem>>, %arg14: memref<1x64x32xbf16, #tpu.memory_space<vmem>>, %arg15: memref<1x1x32xf32, #tpu.memory_space<vmem>>, %arg16: memref<1x32xf32, #tpu.memory_space<vmem>>, %arg17: memref<1x32xf32, #tpu.memory_space<vmem>>, %arg18: memref<1x8x32xf32, #tpu.memory_space<vmem>>, %arg19: memref<8x32xf32, #tpu.memory_space<vmem>>, %arg20: memref<8x32xf32, #tpu.memory_space<vmem>>) attributes {dimension_semantics = [#tpu.dimension_semantics<parallel>, #tpu.dimension_semantics<arbitrary>], iteration_bounds = array<i64: 2, 2>, scalar_prefetch = 0 : i64, scratch_operands = 2 : i64, tpu.core_type = #tpu.core_type<tc>, window_params = [{transform_indices = @transform_0, window_bounds = array<i64: 1, 8, 32>}, {transform_indices = @transform_1, window_bounds = array<i64: 1, 1, 8>}, {transform_indices = @transform_2, window_bounds = array<i64: 1, 1, 32>}, {transform_indices = @transform_3, window_bounds = array<i64: 1, 1, 32>}, {transform_indices = @transform_4, window_bounds = array<i64: 1, 32, 96>}, {transform_indices = @transform_5, window_bounds = array<i64: 1, 1, 96>}, {transform_indices = @transform_6, window_bounds = array<i64: 1, 32, 32>}, {transform_indices = @transform_7, window_bounds = array<i64: 1, 1, 32>}, {transform_indices = @transform_8, window_bounds = array<i64: 1, 1, 32>}, {transform_indices = @transform_9, window_bounds = array<i64: 1, 1, 32>}, {transform_indices = @transform_10, window_bounds = array<i64: 1, 32, 64>}, {transform_indices = @transform_11, window_bounds = array<i64: 1, 1, 64>}, {transform_indices = @transform_12, window_bounds = array<i64: 1, 64, 32>}, {transform_indices = @transform_13, window_bounds = array<i64: 1, 1, 32>}, {pipeline_mode = #tpu.pipeline_mode<synchronous>, transform_indices = @transform_14, window_bounds = array<i64: 1, 32>}, {pipeline_mode = #tpu.pipeline_mode<synchronous>, transform_indices = @transform_15, window_bounds = array<i64: 1, 32>}, {transform_indices = @transform_16, window_bounds = array<i64: 1, 8, 32>}]} {
    %c0_i32 = arith.constant 0 : i32
    %0 = arith.cmpi eq, %arg1, %c0_i32 : i32
    %1 = arith.extui %0 : i1 to i32
    %c0_i32_0 = arith.constant 0 : i32
    %2 = arith.cmpi ne, %1, %c0_i32_0 : i32
    scf.if %2 {
      %c0_93 = arith.constant 0 : index
      %c0_94 = arith.constant 0 : index
      %c0_95 = arith.constant 0 : index
      %216 = vector.load %arg2[%c0_93, %c0_94, %c0_95] : memref<1x8x32xf32, #tpu.memory_space<vmem>>, vector<1x8x32xf32>
      %217 = vector.shape_cast %216 : vector<1x8x32xf32> to vector<8x32xf32>
      %c0_96 = arith.constant 0 : index
      %c0_97 = arith.constant 0 : index
      %218 = vector.load %arg19[%c0_96, %c0_97] : memref<8x32xf32, #tpu.memory_space<vmem>>, vector<8x32xf32>
      tpu.vector_store %arg19[%c0_96, %c0_97], %217 {strides = array<i32>} : memref<8x32xf32, #tpu.memory_space<vmem>>, vector<8x32xf32>,
    } else {
    }
    %c0 = arith.constant 0 : index
    %c0_1 = arith.constant 0 : index
    %3 = vector.load %arg19[%c0, %c0_1] : memref<8x32xf32, #tpu.memory_space<vmem>>, vector<8x32xf32>
    %c0_2 = arith.constant 0 : index
    %c0_3 = arith.constant 0 : index
    %c0_4 = arith.constant 0 : index
    %4 = vector.load %arg3[%c0_2, %c0_3, %c0_4] : memref<1x1x8xf32, #tpu.memory_space<vmem>>, vector<1x1x8xf32>
    %5 = vector.shape_cast %4 : vector<1x1x8xf32> to vector<1x8xf32>
    %c0_5 = arith.constant 0 : index
    %c0_6 = arith.constant 0 : index
    %c0_7 = arith.constant 0 : index
    %6 = vector.load %arg4[%c0_5, %c0_6, %c0_7] : memref<1x1x32xf32, #tpu.memory_space<vmem>>, vector<1x1x32xf32>
    %7 = vector.shape_cast %6 : vector<1x1x32xf32> to vector<1x32xf32>
    %c0_8 = arith.constant 0 : index
    %c0_9 = arith.constant 0 : index
    %c0_10 = arith.constant 0 : index
    %8 = vector.load %arg5[%c0_8, %c0_9, %c0_10] : memref<1x1x32xf32, #tpu.memory_space<vmem>>, vector<1x1x32xf32>
    %9 = vector.shape_cast %8 : vector<1x1x32xf32> to vector<1x32xf32>
    %cst = arith.constant dense<0.000000e+00> : vector<8xf32>
    %10 = vector.multi_reduction <add>, %3, %cst [1] : vector<8x32xf32> to vector<8xf32>
    %11 = vector.shape_cast %10 : vector<8xf32> to vector<8x1xf32>
    %cst_11 = arith.constant 3.200000e+01 : f32
    %12 = vector.broadcast %cst_11 : f32 to vector<8x1xf32>
    %13 = arith.divf %11, %12 : vector<8x1xf32>
    %14 = vector.broadcast %13 : vector<8x1xf32> to vector<8x32xf32>
    %15 = arith.subf %3, %14 : vector<8x32xf32>
    %16 = arith.mulf %15, %15 : vector<8x32xf32>
    %cst_12 = arith.constant dense<0.000000e+00> : vector<8xf32>
    %17 = vector.multi_reduction <add>, %16, %cst_12 [1] : vector<8x32xf32> to vector<8xf32>
    %18 = vector.shape_cast %17 : vector<8xf32> to vector<8x1xf32>
    %cst_13 = arith.constant 0.0322580636 : f32
    %19 = vector.broadcast %cst_13 : f32 to vector<8x1xf32>
    %20 = arith.mulf %18, %19 : vector<8x1xf32>
    %21 = math.sqrt %20 : vector<8x1xf32>
    %cst_14 = arith.constant 9.99999997E-7 : f32
    %22 = vector.broadcast %cst_14 : f32 to vector<8x1xf32>
    %23 = arith.addf %21, %22 : vector<8x1xf32>
    %24 = tpu.reciprocal %23 {approx = true} : vector<8x1xf32> -> vector<8x1xf32>
    %25 = vector.broadcast %24 : vector<8x1xf32> to vector<8x32xf32>
    %26 = arith.mulf %15, %25 : vector<8x32xf32>
    %27 = vector.broadcast %7 : vector<1x32xf32> to vector<8x32xf32>
    %28 = arith.mulf %27, %26 : vector<8x32xf32>
    %29 = vector.broadcast %9 : vector<1x32xf32> to vector<8x32xf32>
    %30 = arith.addf %28, %29 : vector<8x32xf32>
    %31 = arith.truncf %30 : vector<8x32xf32> to vector<8x32xbf16>
    %c0_15 = arith.constant 0 : index
    %c0_16 = arith.constant 0 : index
    %c0_17 = arith.constant 0 : index
    %32 = vector.load %arg6[%c0_15, %c0_16, %c0_17] : memref<1x32x96xbf16, #tpu.memory_space<vmem>>, vector<1x32x96xbf16>
    %33 = vector.shape_cast %32 : vector<1x32x96xbf16> to vector<32x96xbf16>
    %cst_18 = arith.constant dense<0.000000e+00> : vector<8x96xf32>
    %34 = tpu.matmul %31, %33, %cst_18 {dimension_numbers = #tpu.dot_dimension_numbers<[1], [0], [0], [1], [0, 0, 1, 1], [], []>} : vector<8x32xbf16>, vector<32x96xbf16>, vector<8x96xf32> -> vector<8x96xf32>
    %c0_19 = arith.constant 0 : index
    %c0_20 = arith.constant 0 : index
    %c0_21 = arith.constant 0 : index
    %35 = vector.load %arg7[%c0_19, %c0_20, %c0_21] : memref<1x1x96xf32, #tpu.memory_space<vmem>>, vector<1x1x96xf32>
    %36 = vector.shape_cast %35 : vector<1x1x96xf32> to vector<1x96xf32>
    %37 = vector.broadcast %36 : vector<1x96xf32> to vector<8x96xf32>
    %38 = arith.addf %34, %37 : vector<8x96xf32>
    %39 = vector.extract_strided_slice %38 {offsets = [0, 0], sizes = [8, 32], strides = [1, 1]} : vector<8x96xf32> to vector<8x32xf32>
    %40 = vector.extract_strided_slice %38 {offsets = [0, 32], sizes = [8, 32], strides = [1, 1]} : vector<8x96xf32> to vector<8x32xf32>
    %41 = vector.extract_strided_slice %38 {offsets = [0, 64], sizes = [8, 32], strides = [1, 1]} : vector<8x96xf32> to vector<8x32xf32>
    %42 = vector.extract_strided_slice %39 {offsets = [0, 0], sizes = [8, 8], strides = [1, 1]} : vector<8x32xf32> to vector<8x8xf32>
    %43 = arith.truncf %42 : vector<8x8xf32> to vector<8x8xbf16>
    %44 = vector.extract_strided_slice %40 {offsets = [0, 0], sizes = [8, 8], strides = [1, 1]} : vector<8x32xf32> to vector<8x8xf32>
    %45 = arith.truncf %44 : vector<8x8xf32> to vector<8x8xbf16>
    %46 = vector.extract_strided_slice %41 {offsets = [0, 0], sizes = [8, 8], strides = [1, 1]} : vector<8x32xf32> to vector<8x8xf32>
    %47 = arith.truncf %46 : vector<8x8xf32> to vector<8x8xbf16>
    %48 = tpu.transpose %45, [1, 0] : vector<8x8xbf16> -> vector<8x8xbf16>
    %cst_22 = arith.constant dense<0.000000e+00> : vector<8x8xf32>
    %49 = tpu.matmul %43, %48, %cst_22 {dimension_numbers = #tpu.dot_dimension_numbers<[1], [0], [0], [1], [0, 0, 1, 1], [], []>} : vector<8x8xbf16>, vector<8x8xbf16>, vector<8x8xf32> -> vector<8x8xf32>
    %cst_23 = arith.constant 0.353553385 : f32
    %50 = vector.broadcast %cst_23 : f32 to vector<8x8xf32>
    %51 = arith.mulf %49, %50 : vector<8x8xf32>
    %cst_24 = arith.constant 0.000000e+00 : f32
    %52 = vector.broadcast %cst_24 : f32 to vector<1x8xf32>
    %53 = arith.cmpf oeq, %5, %52 : vector<1x8xf32>
    %cst_25 = arith.constant -1.000000e+09 : f32
    %54 = vector.shape_cast %53 : vector<1x8xi1> to vector<1x8xi1>
    %55 = vector.broadcast %54 : vector<1x8xi1> to vector<8x8xi1>
    %56 = vector.broadcast %cst_25 : f32 to vector<8x8xf32>
    %57 = arith.select %55, %56, %51 : vector<8x8xi1>, vector<8x8xf32>
    %cst_26 = arith.constant dense<0xFF800000> : vector<8xf32>
    %58 = vector.multi_reduction <maximumf>, %57, %cst_26 [1] : vector<8x8xf32> to vector<8xf32>
    %59 = vector.shape_cast %58 : vector<8xf32> to vector<8x1xf32>
    %60 = vector.broadcast %59 : vector<8x1xf32> to vector<8x8xf32>
    %61 = arith.subf %57, %60 : vector<8x8xf32>
    %62 = math.exp %61 : vector<8x8xf32>
    %cst_27 = arith.constant dense<0.000000e+00> : vector<8xf32>
    %63 = vector.multi_reduction <add>, %62, %cst_27 [1] : vector<8x8xf32> to vector<8xf32>
    %64 = vector.shape_cast %63 : vector<8xf32> to vector<8x1xf32>
    %65 = tpu.reciprocal %64 {approx = true} : vector<8x1xf32> -> vector<8x1xf32>
    %66 = vector.broadcast %65 : vector<8x1xf32> to vector<8x8xf32>
    %67 = arith.mulf %62, %66 : vector<8x8xf32>
    %68 = arith.truncf %67 : vector<8x8xf32> to vector<8x8xbf16>
    %cst_28 = arith.constant dense<0.000000e+00> : vector<8x8xf32>
    %69 = tpu.matmul %68, %47, %cst_28 {dimension_numbers = #tpu.dot_dimension_numbers<[1], [0], [0], [1], [0, 0, 1, 1], [], []>} : vector<8x8xbf16>, vector<8x8xbf16>, vector<8x8xf32> -> vector<8x8xf32>
    %c0_29 = arith.constant 0 : index
    %c0_30 = arith.constant 0 : index
    %70 = vector.load %arg20[%c0_29, %c0_30] : memref<8x32xf32, #tpu.memory_space<vmem>>, vector<8x8xf32>
    tpu.vector_store %arg20[%c0_29, %c0_30], %69 {strides = array<i32>} : memref<8x32xf32, #tpu.memory_space<vmem>>, vector<8x8xf32>,
    %71 = vector.extract_strided_slice %39 {offsets = [0, 8], sizes = [8, 8], strides = [1, 1]} : vector<8x32xf32> to vector<8x8xf32>
    %72 = arith.truncf %71 : vector<8x8xf32> to vector<8x8xbf16>
    %73 = vector.extract_strided_slice %40 {offsets = [0, 8], sizes = [8, 8], strides = [1, 1]} : vector<8x32xf32> to vector<8x8xf32>
    %74 = arith.truncf %73 : vector<8x8xf32> to vector<8x8xbf16>
    %75 = vector.extract_strided_slice %41 {offsets = [0, 8], sizes = [8, 8], strides = [1, 1]} : vector<8x32xf32> to vector<8x8xf32>
    %76 = arith.truncf %75 : vector<8x8xf32> to vector<8x8xbf16>
    %77 = tpu.transpose %74, [1, 0] : vector<8x8xbf16> -> vector<8x8xbf16>
    %cst_31 = arith.constant dense<0.000000e+00> : vector<8x8xf32>
    %78 = tpu.matmul %72, %77, %cst_31 {dimension_numbers = #tpu.dot_dimension_numbers<[1], [0], [0], [1], [0, 0, 1, 1], [], []>} : vector<8x8xbf16>, vector<8x8xbf16>, vector<8x8xf32> -> vector<8x8xf32>
    %cst_32 = arith.constant 0.353553385 : f32
    %79 = vector.broadcast %cst_32 : f32 to vector<8x8xf32>
    %80 = arith.mulf %78, %79 : vector<8x8xf32>
    %cst_33 = arith.constant 0.000000e+00 : f32
    %81 = vector.broadcast %cst_33 : f32 to vector<1x8xf32>
    %82 = arith.cmpf oeq, %5, %81 : vector<1x8xf32>
    %cst_34 = arith.constant -1.000000e+09 : f32
    %83 = vector.shape_cast %82 : vector<1x8xi1> to vector<1x8xi1>
    %84 = vector.broadcast %83 : vector<1x8xi1> to vector<8x8xi1>
    %85 = vector.broadcast %cst_34 : f32 to vector<8x8xf32>
    %86 = arith.select %84, %85, %80 : vector<8x8xi1>, vector<8x8xf32>
    %cst_35 = arith.constant dense<0xFF800000> : vector<8xf32>
    %87 = vector.multi_reduction <maximumf>, %86, %cst_35 [1] : vector<8x8xf32> to vector<8xf32>
    %88 = vector.shape_cast %87 : vector<8xf32> to vector<8x1xf32>
    %89 = vector.broadcast %88 : vector<8x1xf32> to vector<8x8xf32>
    %90 = arith.subf %86, %89 : vector<8x8xf32>
    %91 = math.exp %90 : vector<8x8xf32>
    %cst_36 = arith.constant dense<0.000000e+00> : vector<8xf32>
    %92 = vector.multi_reduction <add>, %91, %cst_36 [1] : vector<8x8xf32> to vector<8xf32>
    %93 = vector.shape_cast %92 : vector<8xf32> to vector<8x1xf32>
    %94 = tpu.reciprocal %93 {approx = true} : vector<8x1xf32> -> vector<8x1xf32>
    %95 = vector.broadcast %94 : vector<8x1xf32> to vector<8x8xf32>
    %96 = arith.mulf %91, %95 : vector<8x8xf32>
    %97 = arith.truncf %96 : vector<8x8xf32> to vector<8x8xbf16>
    %cst_37 = arith.constant dense<0.000000e+00> : vector<8x8xf32>
    %98 = tpu.matmul %97, %76, %cst_37 {dimension_numbers = #tpu.dot_dimension_numbers<[1], [0], [0], [1], [0, 0, 1, 1], [], []>} : vector<8x8xbf16>, vector<8x8xbf16>, vector<8x8xf32> -> vector<8x8xf32>
    %c0_38 = arith.constant 0 : index
    %c8 = arith.constant 8 : index
    %99 = vector.load %arg20[%c0_38, %c8] : memref<8x32xf32, #tpu.memory_space<vmem>>, vector<8x8xf32>
    tpu.vector_store %arg20[%c0_38, %c8], %98 {strides = array<i32>} : memref<8x32xf32, #tpu.memory_space<vmem>>, vector<8x8xf32>,
    %100 = vector.extract_strided_slice %39 {offsets = [0, 16], sizes = [8, 8], strides = [1, 1]} : vector<8x32xf32> to vector<8x8xf32>
    %101 = arith.truncf %100 : vector<8x8xf32> to vector<8x8xbf16>
    %102 = vector.extract_strided_slice %40 {offsets = [0, 16], sizes = [8, 8], strides = [1, 1]} : vector<8x32xf32> to vector<8x8xf32>
    %103 = arith.truncf %102 : vector<8x8xf32> to vector<8x8xbf16>
    %104 = vector.extract_strided_slice %41 {offsets = [0, 16], sizes = [8, 8], strides = [1, 1]} : vector<8x32xf32> to vector<8x8xf32>
    %105 = arith.truncf %104 : vector<8x8xf32> to vector<8x8xbf16>
    %106 = tpu.transpose %103, [1, 0] : vector<8x8xbf16> -> vector<8x8xbf16>
    %cst_39 = arith.constant dense<0.000000e+00> : vector<8x8xf32>
    %107 = tpu.matmul %101, %106, %cst_39 {dimension_numbers = #tpu.dot_dimension_numbers<[1], [0], [0], [1], [0, 0, 1, 1], [], []>} : vector<8x8xbf16>, vector<8x8xbf16>, vector<8x8xf32> -> vector<8x8xf32>
    %cst_40 = arith.constant 0.353553385 : f32
    %108 = vector.broadcast %cst_40 : f32 to vector<8x8xf32>
    %109 = arith.mulf %107, %108 : vector<8x8xf32>
    %cst_41 = arith.constant 0.000000e+00 : f32
    %110 = vector.broadcast %cst_41 : f32 to vector<1x8xf32>
    %111 = arith.cmpf oeq, %5, %110 : vector<1x8xf32>
    %cst_42 = arith.constant -1.000000e+09 : f32
    %112 = vector.shape_cast %111 : vector<1x8xi1> to vector<1x8xi1>
    %113 = vector.broadcast %112 : vector<1x8xi1> to vector<8x8xi1>
    %114 = vector.broadcast %cst_42 : f32 to vector<8x8xf32>
    %115 = arith.select %113, %114, %109 : vector<8x8xi1>, vector<8x8xf32>
    %cst_43 = arith.constant dense<0xFF800000> : vector<8xf32>
    %116 = vector.multi_reduction <maximumf>, %115, %cst_43 [1] : vector<8x8xf32> to vector<8xf32>
    %117 = vector.shape_cast %116 : vector<8xf32> to vector<8x1xf32>
    %118 = vector.broadcast %117 : vector<8x1xf32> to vector<8x8xf32>
    %119 = arith.subf %115, %118 : vector<8x8xf32>
    %120 = math.exp %119 : vector<8x8xf32>
    %cst_44 = arith.constant dense<0.000000e+00> : vector<8xf32>
    %121 = vector.multi_reduction <add>, %120, %cst_44 [1] : vector<8x8xf32> to vector<8xf32>
    %122 = vector.shape_cast %121 : vector<8xf32> to vector<8x1xf32>
    %123 = tpu.reciprocal %122 {approx = true} : vector<8x1xf32> -> vector<8x1xf32>
    %124 = vector.broadcast %123 : vector<8x1xf32> to vector<8x8xf32>
    %125 = arith.mulf %120, %124 : vector<8x8xf32>
    %126 = arith.truncf %125 : vector<8x8xf32> to vector<8x8xbf16>
    %cst_45 = arith.constant dense<0.000000e+00> : vector<8x8xf32>
    %127 = tpu.matmul %126, %105, %cst_45 {dimension_numbers = #tpu.dot_dimension_numbers<[1], [0], [0], [1], [0, 0, 1, 1], [], []>} : vector<8x8xbf16>, vector<8x8xbf16>, vector<8x8xf32> -> vector<8x8xf32>
    %c0_46 = arith.constant 0 : index
    %c16 = arith.constant 16 : index
    %128 = vector.load %arg20[%c0_46, %c16] : memref<8x32xf32, #tpu.memory_space<vmem>>, vector<8x8xf32>
    tpu.vector_store %arg20[%c0_46, %c16], %127 {strides = array<i32>} : memref<8x32xf32, #tpu.memory_space<vmem>>, vector<8x8xf32>,
    %129 = vector.extract_strided_slice %39 {offsets = [0, 24], sizes = [8, 8], strides = [1, 1]} : vector<8x32xf32> to vector<8x8xf32>
    %130 = arith.truncf %129 : vector<8x8xf32> to vector<8x8xbf16>
    %131 = vector.extract_strided_slice %40 {offsets = [0, 24], sizes = [8, 8], strides = [1, 1]} : vector<8x32xf32> to vector<8x8xf32>
    %132 = arith.truncf %131 : vector<8x8xf32> to vector<8x8xbf16>
    %133 = vector.extract_strided_slice %41 {offsets = [0, 24], sizes = [8, 8], strides = [1, 1]} : vector<8x32xf32> to vector<8x8xf32>
    %134 = arith.truncf %133 : vector<8x8xf32> to vector<8x8xbf16>
    %135 = tpu.transpose %132, [1, 0] : vector<8x8xbf16> -> vector<8x8xbf16>
    %cst_47 = arith.constant dense<0.000000e+00> : vector<8x8xf32>
    %136 = tpu.matmul %130, %135, %cst_47 {dimension_numbers = #tpu.dot_dimension_numbers<[1], [0], [0], [1], [0, 0, 1, 1], [], []>} : vector<8x8xbf16>, vector<8x8xbf16>, vector<8x8xf32> -> vector<8x8xf32>
    %cst_48 = arith.constant 0.353553385 : f32
    %137 = vector.broadcast %cst_48 : f32 to vector<8x8xf32>
    %138 = arith.mulf %136, %137 : vector<8x8xf32>
    %cst_49 = arith.constant 0.000000e+00 : f32
    %139 = vector.broadcast %cst_49 : f32 to vector<1x8xf32>
    %140 = arith.cmpf oeq, %5, %139 : vector<1x8xf32>
    %cst_50 = arith.constant -1.000000e+09 : f32
    %141 = vector.shape_cast %140 : vector<1x8xi1> to vector<1x8xi1>
    %142 = vector.broadcast %141 : vector<1x8xi1> to vector<8x8xi1>
    %143 = vector.broadcast %cst_50 : f32 to vector<8x8xf32>
    %144 = arith.select %142, %143, %138 : vector<8x8xi1>, vector<8x8xf32>
    %cst_51 = arith.constant dense<0xFF800000> : vector<8xf32>
    %145 = vector.multi_reduction <maximumf>, %144, %cst_51 [1] : vector<8x8xf32> to vector<8xf32>
    %146 = vector.shape_cast %145 : vector<8xf32> to vector<8x1xf32>
    %147 = vector.broadcast %146 : vector<8x1xf32> to vector<8x8xf32>
    %148 = arith.subf %144, %147 : vector<8x8xf32>
    %149 = math.exp %148 : vector<8x8xf32>
    %cst_52 = arith.constant dense<0.000000e+00> : vector<8xf32>
    %150 = vector.multi_reduction <add>, %149, %cst_52 [1] : vector<8x8xf32> to vector<8xf32>
    %151 = vector.shape_cast %150 : vector<8xf32> to vector<8x1xf32>
    %152 = tpu.reciprocal %151 {approx = true} : vector<8x1xf32> -> vector<8x1xf32>
    %153 = vector.broadcast %152 : vector<8x1xf32> to vector<8x8xf32>
    %154 = arith.mulf %149, %153 : vector<8x8xf32>
    %155 = arith.truncf %154 : vector<8x8xf32> to vector<8x8xbf16>
    %cst_53 = arith.constant dense<0.000000e+00> : vector<8x8xf32>
    %156 = tpu.matmul %155, %134, %cst_53 {dimension_numbers = #tpu.dot_dimension_numbers<[1], [0], [0], [1], [0, 0, 1, 1], [], []>} : vector<8x8xbf16>, vector<8x8xbf16>, vector<8x8xf32> -> vector<8x8xf32>
    %c0_54 = arith.constant 0 : index
    %c24 = arith.constant 24 : index
    %157 = vector.load %arg20[%c0_54, %c24] : memref<8x32xf32, #tpu.memory_space<vmem>>, vector<8x8xf32>
    tpu.vector_store %arg20[%c0_54, %c24], %156 {strides = array<i32>} : memref<8x32xf32, #tpu.memory_space<vmem>>, vector<8x8xf32>,
    %c0_55 = arith.constant 0 : index
    %c0_56 = arith.constant 0 : index
    %158 = vector.load %arg20[%c0_55, %c0_56] : memref<8x32xf32, #tpu.memory_space<vmem>>, vector<8x32xf32>
    %159 = arith.truncf %158 : vector<8x32xf32> to vector<8x32xbf16>
    %c0_57 = arith.constant 0 : index
    %c0_58 = arith.constant 0 : index
    %c0_59 = arith.constant 0 : index
    %160 = vector.load %arg8[%c0_57, %c0_58, %c0_59] : memref<1x32x32xbf16, #tpu.memory_space<vmem>>, vector<1x32x32xbf16>
    %161 = vector.shape_cast %160 : vector<1x32x32xbf16> to vector<32x32xbf16>
    %cst_60 = arith.constant dense<0.000000e+00> : vector<8x32xf32>
    %162 = tpu.matmul %159, %161, %cst_60 {dimension_numbers = #tpu.dot_dimension_numbers<[1], [0], [0], [1], [0, 0, 1, 1], [], []>} : vector<8x32xbf16>, vector<32x32xbf16>, vector<8x32xf32> -> vector<8x32xf32>
    %c0_61 = arith.constant 0 : index
    %c0_62 = arith.constant 0 : index
    %c0_63 = arith.constant 0 : index
    %163 = vector.load %arg9[%c0_61, %c0_62, %c0_63] : memref<1x1x32xf32, #tpu.memory_space<vmem>>, vector<1x1x32xf32>
    %164 = vector.shape_cast %163 : vector<1x1x32xf32> to vector<1x32xf32>
    %165 = vector.broadcast %164 : vector<1x32xf32> to vector<8x32xf32>
    %166 = arith.addf %162, %165 : vector<8x32xf32>
    %167 = arith.addf %3, %166 : vector<8x32xf32>
    %c0_64 = arith.constant 0 : index
    %c0_65 = arith.constant 0 : index
    %c0_66 = arith.constant 0 : index
    %168 = vector.load %arg10[%c0_64, %c0_65, %c0_66] : memref<1x1x32xf32, #tpu.memory_space<vmem>>, vector<1x1x32xf32>
    %169 = vector.shape_cast %168 : vector<1x1x32xf32> to vector<1x32xf32>
    %c0_67 = arith.constant 0 : index
    %c0_68 = arith.constant 0 : index
    %c0_69 = arith.constant 0 : index
    %170 = vector.load %arg11[%c0_67, %c0_68, %c0_69] : memref<1x1x32xf32, #tpu.memory_space<vmem>>, vector<1x1x32xf32>
    %171 = vector.shape_cast %170 : vector<1x1x32xf32> to vector<1x32xf32>
    %cst_70 = arith.constant dense<0.000000e+00> : vector<8xf32>
    %172 = vector.multi_reduction <add>, %167, %cst_70 [1] : vector<8x32xf32> to vector<8xf32>
    %173 = vector.shape_cast %172 : vector<8xf32> to vector<8x1xf32>
    %cst_71 = arith.constant 3.200000e+01 : f32
    %174 = vector.broadcast %cst_71 : f32 to vector<8x1xf32>
    %175 = arith.divf %173, %174 : vector<8x1xf32>
    %176 = vector.broadcast %175 : vector<8x1xf32> to vector<8x32xf32>
    %177 = arith.subf %167, %176 : vector<8x32xf32>
    %178 = arith.mulf %177, %177 : vector<8x32xf32>
    %cst_72 = arith.constant dense<0.000000e+00> : vector<8xf32>
    %179 = vector.multi_reduction <add>, %178, %cst_72 [1] : vector<8x32xf32> to vector<8xf32>
    %180 = vector.shape_cast %179 : vector<8xf32> to vector<8x1xf32>
    %cst_73 = arith.constant 0.0322580636 : f32
    %181 = vector.broadcast %cst_73 : f32 to vector<8x1xf32>
    %182 = arith.mulf %180, %181 : vector<8x1xf32>
    %183 = math.sqrt %182 : vector<8x1xf32>
    %cst_74 = arith.constant 9.99999997E-7 : f32
    %184 = vector.broadcast %cst_74 : f32 to vector<8x1xf32>
    %185 = arith.addf %183, %184 : vector<8x1xf32>
    %186 = tpu.reciprocal %185 {approx = true} : vector<8x1xf32> -> vector<8x1xf32>
    %187 = vector.broadcast %186 : vector<8x1xf32> to vector<8x32xf32>
    %188 = arith.mulf %177, %187 : vector<8x32xf32>
    %189 = vector.broadcast %169 : vector<1x32xf32> to vector<8x32xf32>
    %190 = arith.mulf %189, %188 : vector<8x32xf32>
    %191 = vector.broadcast %171 : vector<1x32xf32> to vector<8x32xf32>
    %192 = arith.addf %190, %191 : vector<8x32xf32>
    %193 = arith.truncf %192 : vector<8x32xf32> to vector<8x32xbf16>
    %c0_75 = arith.constant 0 : index
    %c0_76 = arith.constant 0 : index
    %c0_77 = arith.constant 0 : index
    %194 = vector.load %arg12[%c0_75, %c0_76, %c0_77] : memref<1x32x64xbf16, #tpu.memory_space<vmem>>, vector<1x32x64xbf16>
    %195 = vector.shape_cast %194 : vector<1x32x64xbf16> to vector<32x64xbf16>
    %cst_78 = arith.constant dense<0.000000e+00> : vector<8x64xf32>
    %196 = tpu.matmul %193, %195, %cst_78 {dimension_numbers = #tpu.dot_dimension_numbers<[1], [0], [0], [1], [0, 0, 1, 1], [], []>} : vector<8x32xbf16>, vector<32x64xbf16>, vector<8x64xf32> -> vector<8x64xf32>
    %c0_79 = arith.constant 0 : index
    %c0_80 = arith.constant 0 : index
    %c0_81 = arith.constant 0 : index
    %197 = vector.load %arg13[%c0_79, %c0_80, %c0_81] : memref<1x1x64xf32, #tpu.memory_space<vmem>>, vector<1x1x64xf32>
    %198 = vector.shape_cast %197 : vector<1x1x64xf32> to vector<1x64xf32>
    %199 = vector.broadcast %198 : vector<1x64xf32> to vector<8x64xf32>
    %200 = arith.addf %196, %199 : vector<8x64xf32>
    %cst_82 = arith.constant 0.000000e+00 : f32
    %201 = vector.broadcast %cst_82 : f32 to vector<8x64xf32>
    %202 = arith.maximumf %200, %201 : vector<8x64xf32>
    %203 = arith.truncf %202 : vector<8x64xf32> to vector<8x64xbf16>
    %c0_83 = arith.constant 0 : index
    %c0_84 = arith.constant 0 : index
    %c0_85 = arith.constant 0 : index
    %204 = vector.load %arg14[%c0_83, %c0_84, %c0_85] : memref<1x64x32xbf16, #tpu.memory_space<vmem>>, vector<1x64x32xbf16>
    %205 = vector.shape_cast %204 : vector<1x64x32xbf16> to vector<64x32xbf16>
    %cst_86 = arith.constant dense<0.000000e+00> : vector<8x32xf32>
    %206 = tpu.matmul %203, %205, %cst_86 {dimension_numbers = #tpu.dot_dimension_numbers<[1], [0], [0], [1], [0, 0, 1, 1], [], []>} : vector<8x64xbf16>, vector<64x32xbf16>, vector<8x32xf32> -> vector<8x32xf32>
    %c0_87 = arith.constant 0 : index
    %c0_88 = arith.constant 0 : index
    %c0_89 = arith.constant 0 : index
    %207 = vector.load %arg15[%c0_87, %c0_88, %c0_89] : memref<1x1x32xf32, #tpu.memory_space<vmem>>, vector<1x1x32xf32>
    %208 = vector.shape_cast %207 : vector<1x1x32xf32> to vector<1x32xf32>
    %209 = vector.broadcast %208 : vector<1x32xf32> to vector<8x32xf32>
    %210 = arith.addf %206, %209 : vector<8x32xf32>
    %211 = arith.addf %167, %210 : vector<8x32xf32>
    %c0_90 = arith.constant 0 : index
    %c0_91 = arith.constant 0 : index
    %212 = vector.load %arg19[%c0_90, %c0_91] : memref<8x32xf32, #tpu.memory_space<vmem>>, vector<8x32xf32>
    tpu.vector_store %arg19[%c0_90, %c0_91], %211 {strides = array<i32>} : memref<8x32xf32, #tpu.memory_space<vmem>>, vector<8x32xf32>,
    %c1_i32 = arith.constant 1 : i32
    %213 = arith.cmpi eq, %arg1, %c1_i32 : i32
    %214 = arith.extui %213 : i1 to i32
    %c0_i32_92 = arith.constant 0 : i32
    %215 = arith.cmpi ne, %214, %c0_i32_92 : i32
    scf.if %215 {
      %c0_93 = arith.constant 0 : index
      %c0_94 = arith.constant 0 : index
      %216 = vector.load %arg16[%c0_93, %c0_94] : memref<1x32xf32, #tpu.memory_space<vmem>>, vector<1x32xf32>
      %c0_95 = arith.constant 0 : index
      %c0_96 = arith.constant 0 : index
      %217 = vector.load %arg17[%c0_95, %c0_96] : memref<1x32xf32, #tpu.memory_space<vmem>>, vector<1x32xf32>
      %cst_97 = arith.constant dense<0.000000e+00> : vector<8xf32>
      %218 = vector.multi_reduction <add>, %211, %cst_97 [1] : vector<8x32xf32> to vector<8xf32>
      %219 = vector.shape_cast %218 : vector<8xf32> to vector<8x1xf32>
      %cst_98 = arith.constant 3.200000e+01 : f32
      %220 = vector.broadcast %cst_98 : f32 to vector<8x1xf32>
      %221 = arith.divf %219, %220 : vector<8x1xf32>
      %222 = vector.broadcast %221 : vector<8x1xf32> to vector<8x32xf32>
      %223 = arith.subf %211, %222 : vector<8x32xf32>
      %224 = arith.mulf %223, %223 : vector<8x32xf32>
      %cst_99 = arith.constant dense<0.000000e+00> : vector<8xf32>
      %225 = vector.multi_reduction <add>, %224, %cst_99 [1] : vector<8x32xf32> to vector<8xf32>
      %226 = vector.shape_cast %225 : vector<8xf32> to vector<8x1xf32>
      %cst_100 = arith.constant 0.0322580636 : f32
      %227 = vector.broadcast %cst_100 : f32 to vector<8x1xf32>
      %228 = arith.mulf %226, %227 : vector<8x1xf32>
      %229 = math.sqrt %228 : vector<8x1xf32>
      %cst_101 = arith.constant 9.99999997E-7 : f32
      %230 = vector.broadcast %cst_101 : f32 to vector<8x1xf32>
      %231 = arith.addf %229, %230 : vector<8x1xf32>
      %232 = tpu.reciprocal %231 {approx = true} : vector<8x1xf32> -> vector<8x1xf32>
      %233 = vector.broadcast %232 : vector<8x1xf32> to vector<8x32xf32>
      %234 = arith.mulf %223, %233 : vector<8x32xf32>
      %235 = vector.broadcast %216 : vector<1x32xf32> to vector<8x32xf32>
      %236 = arith.mulf %235, %234 : vector<8x32xf32>
      %237 = vector.broadcast %217 : vector<1x32xf32> to vector<8x32xf32>
      %238 = arith.addf %236, %237 : vector<8x32xf32>
      %c0_102 = arith.constant 0 : index
      %c0_103 = arith.constant 0 : index
      %c0_104 = arith.constant 0 : index
      %239 = vector.load %arg18[%c0_102, %c0_103, %c0_104] : memref<1x8x32xf32, #tpu.memory_space<vmem>>, vector<1x8x32xf32>
      %240 = vector.shape_cast %239 : vector<1x8x32xf32> to vector<8x32xf32>
      %241 = vector.shape_cast %238 : vector<8x32xf32> to vector<1x8x32xf32>
      tpu.vector_store %arg18[%c0_102, %c0_103, %c0_104], %241 {strides = array<i32>} : memref<1x8x32xf32, #tpu.memory_space<vmem>>, vector<1x8x32xf32>,
    } else {
    }
    return
  }
  func.func @transform_0(%arg0: i32, %arg1: i32) -> (i32, i32, i32) {
    %c0_i32 = arith.constant 0 : i32
    %c0_i32_0 = arith.constant 0 : i32
    %c0_i32_1 = arith.constant 0 : i32
    return %arg0, %c0_i32, %c0_i32_0 : i32, i32, i32
  }
  func.func @transform_1(%arg0: i32, %arg1: i32) -> (i32, i32, i32) {
    %c0_i32 = arith.constant 0 : i32
    %c0_i32_0 = arith.constant 0 : i32
    %c0_i32_1 = arith.constant 0 : i32
    return %arg0, %c0_i32, %c0_i32_0 : i32, i32, i32
  }
  func.func @transform_2(%arg0: i32, %arg1: i32) -> (i32, i32, i32) {
    %c0_i32 = arith.constant 0 : i32
    %c0_i32_0 = arith.constant 0 : i32
    %c0_i32_1 = arith.constant 0 : i32
    return %arg1, %c0_i32, %c0_i32_0 : i32, i32, i32
  }
  func.func @transform_3(%arg0: i32, %arg1: i32) -> (i32, i32, i32) {
    %c0_i32 = arith.constant 0 : i32
    %c0_i32_0 = arith.constant 0 : i32
    %c0_i32_1 = arith.constant 0 : i32
    return %arg1, %c0_i32, %c0_i32_0 : i32, i32, i32
  }
  func.func @transform_4(%arg0: i32, %arg1: i32) -> (i32, i32, i32) {
    %c0_i32 = arith.constant 0 : i32
    %c0_i32_0 = arith.constant 0 : i32
    %c0_i32_1 = arith.constant 0 : i32
    return %arg1, %c0_i32, %c0_i32_0 : i32, i32, i32
  }
  func.func @transform_5(%arg0: i32, %arg1: i32) -> (i32, i32, i32) {
    %c0_i32 = arith.constant 0 : i32
    %c0_i32_0 = arith.constant 0 : i32
    %c0_i32_1 = arith.constant 0 : i32
    return %arg1, %c0_i32, %c0_i32_0 : i32, i32, i32
  }
  func.func @transform_6(%arg0: i32, %arg1: i32) -> (i32, i32, i32) {
    %c0_i32 = arith.constant 0 : i32
    %c0_i32_0 = arith.constant 0 : i32
    %c0_i32_1 = arith.constant 0 : i32
    return %arg1, %c0_i32, %c0_i32_0 : i32, i32, i32
  }
  func.func @transform_7(%arg0: i32, %arg1: i32) -> (i32, i32, i32) {
    %c0_i32 = arith.constant 0 : i32
    %c0_i32_0 = arith.constant 0 : i32
    %c0_i32_1 = arith.constant 0 : i32
    return %arg1, %c0_i32, %c0_i32_0 : i32, i32, i32
  }
  func.func @transform_8(%arg0: i32, %arg1: i32) -> (i32, i32, i32) {
    %c0_i32 = arith.constant 0 : i32
    %c0_i32_0 = arith.constant 0 : i32
    %c0_i32_1 = arith.constant 0 : i32
    return %arg1, %c0_i32, %c0_i32_0 : i32, i32, i32
  }
  func.func @transform_9(%arg0: i32, %arg1: i32) -> (i32, i32, i32) {
    %c0_i32 = arith.constant 0 : i32
    %c0_i32_0 = arith.constant 0 : i32
    %c0_i32_1 = arith.constant 0 : i32
    return %arg1, %c0_i32, %c0_i32_0 : i32, i32, i32
  }
  func.func @transform_10(%arg0: i32, %arg1: i32) -> (i32, i32, i32) {
    %c0_i32 = arith.constant 0 : i32
    %c0_i32_0 = arith.constant 0 : i32
    %c0_i32_1 = arith.constant 0 : i32
    return %arg1, %c0_i32, %c0_i32_0 : i32, i32, i32
  }
  func.func @transform_11(%arg0: i32, %arg1: i32) -> (i32, i32, i32) {
    %c0_i32 = arith.constant 0 : i32
    %c0_i32_0 = arith.constant 0 : i32
    %c0_i32_1 = arith.constant 0 : i32
    return %arg1, %c0_i32, %c0_i32_0 : i32, i32, i32
  }
  func.func @transform_12(%arg0: i32, %arg1: i32) -> (i32, i32, i32) {
    %c0_i32 = arith.constant 0 : i32
    %c0_i32_0 = arith.constant 0 : i32
    %c0_i32_1 = arith.constant 0 : i32
    return %arg1, %c0_i32, %c0_i32_0 : i32, i32, i32
  }
  func.func @transform_13(%arg0: i32, %arg1: i32) -> (i32, i32, i32) {
    %c0_i32 = arith.constant 0 : i32
    %c0_i32_0 = arith.constant 0 : i32
    %c0_i32_1 = arith.constant 0 : i32
    return %arg1, %c0_i32, %c0_i32_0 : i32, i32, i32
  }
  func.func @transform_14(%arg0: i32, %arg1: i32) -> (i32, i32) {
    %c0_i32 = arith.constant 0 : i32
    %c0_i32_0 = arith.constant 0 : i32
    %c0_i32_1 = arith.constant 0 : i32
    return %c0_i32, %c0_i32_0 : i32, i32
  }
  func.func @transform_15(%arg0: i32, %arg1: i32) -> (i32, i32) {
    %c0_i32 = arith.constant 0 : i32
    %c0_i32_0 = arith.constant 0 : i32
    %c0_i32_1 = arith.constant 0 : i32
    return %c0_i32, %c0_i32_0 : i32, i32
  }
  func.func @transform_16(%arg0: i32, %arg1: i32) -> (i32, i32, i32) {
    %c0_i32 = arith.constant 0 : i32
    %c0_i32_0 = arith.constant 0 : i32
    %c0_i32_1 = arith.constant 0 : i32
    return %arg0, %c0_i32, %c0_i32_0 : i32, i32, i32
  }
}

</mosaic_0001>

<llo_original>
// kernel: tpu_custom_call.1
$region0: #{tpu_custom_call.1}
  #allocation0 [shape = 'u32[]', space=smem, size = 0x4, offset = 0x4, fixed_abs, tag = 'smem constant byte address 0x4 - core index']
  #allocation1 [shape = 'u32[144,128]{1,0:T(1,128)}', space=vmem, size = 0x12000, scoped, tag = 'internal scratch']
  #allocation2 [shape = 'f32[8,32]{1,0:T(8,128)}', space=vmem, size = 0x1000, scoped, tag = 'scratch operand']
  #allocation3 [shape = 'f32[8,32]{1,0:T(8,128)}', space=vmem, size = 0x1000, scoped, tag = 'scratch operand']
  %s0 = inlined_call_operand.hbm [shape: f32[2,8,32], index: 0, kind: input, shape index: {}]
  %s1 = inlined_call_operand.hbm [shape: f32[2,1,8], index: 1, kind: input, shape index: {}]
  %s2 = inlined_call_operand.vmem [shape: f32[2,1,32], index: 2, kind: input, shape index: {}]
  %s3 = inlined_call_operand.vmem [shape: f32[2,1,32], index: 3, kind: input, shape index: {}]
  %s4 = inlined_call_operand.vmem [shape: bf16[2,32,96], index: 4, kind: input, shape index: {}]
  %s5 = inlined_call_operand.vmem [shape: f32[2,1,96], index: 5, kind: input, shape index: {}]
  %s6 = inlined_call_operand.vmem [shape: bf16[2,32,32], index: 6, kind: input, shape index: {}]
  %s7 = inlined_call_operand.vmem [shape: f32[2,1,32], index: 7, kind: input, shape index: {}]
  %s8 = inlined_call_operand.vmem [shape: f32[2,1,32], index: 8, kind: input, shape index: {}]
  %s9 = inlined_call_operand.vmem [shape: f32[2,1,32], index: 9, kind: input, shape index: {}]
  %s10 = inlined_call_operand.vmem [shape: bf16[2,32,64], index: 10, kind: input, shape index: {}]
  %s11 = inlined_call_operand.vmem [shape: f32[2,1,64], index: 11, kind: input, shape index: {}]
  %s12 = inlined_call_operand.vmem [shape: bf16[2,64,32], index: 12, kind: input, shape index: {}]
  %s13 = inlined_call_operand.vmem [shape: f32[2,1,32], index: 13, kind: input, shape index: {}]
  %s14 = inlined_call_operand.vmem [shape: f32[1,32], index: 14, kind: input, shape index: {}]
  %s15 = inlined_call_operand.vmem [shape: f32[1,32], index: 15, kind: input, shape index: {}]
  %s16 = inlined_call_operand.hbm [shape: f32[2,8,32], index: 16, kind: output, shape index: {}]
  %s17 = sld [smem:[#allocation0]]
  $region113: #{tpu_custom_call.1} parent=0
    _
  %s19 = ssub.s32 1, %s17
  %s20 = scalar_select 0, %s19, %s17
  $region1: #{tpu_custom_call.1} parent=0
    #allocation4 [shape = 'u8[8192]{0}', space=vmem, size = 0x2000, scoped, tag = 'input window, operand 0']
    #allocation5 [shape = 's32[2]{0}', space=sflag, size = 0x8, scoped, tag = 'scoped memory for tpu_custom_call.1']
    #allocation6 [shape = 's32[2]{0}', space=sflag, size = 0x8, scoped, tag = 'scoped memory for tpu_custom_call.1']
    #allocation7 [shape = 'u8[1024]{0}', space=vmem, size = 0x400, scoped, tag = 'input window, operand 1']
    #allocation8 [shape = 's32[2]{0}', space=sflag, size = 0x8, scoped, tag = 'scoped memory for tpu_custom_call.1']
    #allocation9 [shape = 'u8[8192]{0}', space=vmem, size = 0x2000, scoped, tag = 'output window, operand 0']
    %21 = vsyncpa [#allocation5], 0
    %s22 = scalar_lea.sflag [#allocation5], 1
    %23 = vsyncpa %s22, 0
    %24 = vsyncpa [#allocation8], 0
    %s25 = scalar_lea.sflag [#allocation8], 1
    %26 = vsyncpa %s25, 0
    %27 = vsyncpa [#allocation6], 0
    %s28 = scalar_lea.sflag [#allocation6], 1
    %29 = vsyncpa %s28, 0
    loop: start=0, step=1, limit=6
    $region2: #{tpu_custom_call.1} parent=1 // loop_pre_header
      _
    $region3: #{tpu_custom_call.1} parent=1 // loop_header
      %s31 = sphi 0, %s35
      %p32 = scmp.ge.s32.totalorder %s31, 6
      %s38 = sphi 0, %s50
      %s39 = sphi 0, %s46
      %s40 = sphi 0, %s38
      %s41 = sphi 0, %s39
      %s42 = sphi 0, %s40
      %s43 = sphi 0, %s41
      %s53 = sphi 0, %s55
      %s56 = sphi 0, %s53
      %s57 = sphi 0, %s56
      %s73 = sphi 0, %s57
      %s79 = sphi 0, %s81
      %s82 = sphi 0, %s79
      %s83 = sphi 0, %s82
      %s99 = sphi 0, %s83
      %s105 = sphi 0, %s107
      %s108 = sphi 0, %s105
      %s109 = sphi 0, %s108
      %s125 = sphi 0, %s109
      %s131 = sphi 0, %s133
      %s134 = sphi 0, %s131
      %s135 = sphi 0, %s134
      %s151 = sphi 0, %s135
      %s157 = sphi 0, %s159
      %s160 = sphi 0, %s157
      %s161 = sphi 0, %s160
      %s177 = sphi 0, %s161
      %s183 = sphi 0, %s185
      %s186 = sphi 0, %s183
      %s187 = sphi 0, %s186
      %s203 = sphi 0, %s187
      %s209 = sphi 0, %s211
      %s212 = sphi 0, %s209
      %s213 = sphi 0, %s212
      %s229 = sphi 0, %s213
      %s235 = sphi 0, %s237
      %s238 = sphi 0, %s235
      %s239 = sphi 0, %s238
      %s255 = sphi 0, %s239
      %s261 = sphi 0, %s263
      %s264 = sphi 0, %s261
      %s265 = sphi 0, %s264
      %s281 = sphi 0, %s265
      %s287 = sphi 0, %s289
      %s290 = sphi 0, %s287
      %s291 = sphi 0, %s290
      %s307 = sphi 0, %s291
      %s313 = sphi 0, %s315
      %s316 = sphi 0, %s313
      %s317 = sphi 0, %s316
      %s333 = sphi 0, %s317
      %s339 = sphi 0, %s341
      %s342 = sphi 0, %s339
      %s343 = sphi 0, %s342
      %s359 = sphi 0, %s343
      %s365 = sphi 0, %s367
      %s368 = sphi 0, %s365
      %s369 = sphi 0, %s368
      %s385 = sphi 0, %s369
      %s391 = sphi 0, %s393
      %s394 = sphi 0, %s391
      %s395 = sphi 0, %s394
      %s411 = sphi 0, %s395
      %s415 = sphi 0, %s415
      %s417 = sphi 0, %s415
      %s418 = sphi 0, %s417
      %s432 = sphi 0, %s418
      %s436 = sphi 0, %s436
      %s438 = sphi 0, %s436
      %s439 = sphi 0, %s438
      %s453 = sphi 0, %s439
      %s459 = sphi 0, %s461
      %s462 = sphi 0, %s459
      %s463 = sphi 0, %s462
      %s479 = sphi 0, %s463
    $region4: #{tpu_custom_call.1} parent=1 // loop_header_branch
      %34 = sbr.rel (%p32) target = $region8
    $region5: #{tpu_custom_call.1} parent=1 // loop_body
      %s36 = ssub.s32 %s31, 1
      %s37 = ssub.s32 %s31, 2
      %s44 = sadd.s32 1, %s39
      %p45 = scmp.ge.s32.totalorder %s44, 2
      %s46 = scalar_select %p45, 0, %s44
      %s47 = sadd.s32 1, %s38
      %s48 = scalar_select %p45, %s47, %s38
      %p49 = scmp.ge.s32.totalorder %s48, 2
      %s50 = scalar_select %p49, 0, %s48
      %s51 = ssub.s32 %s38, %s50
      %p52 = scmp.eq.s32.totalorder %s51, 0
      %s54 = sadd.s32 %s53, 1
      %s55 = scalar_select %p52, %s53, %s54
      %p58 = pneg %p52
      %p59 = scmp.eq.s32.totalorder %s31, 3
      %p60 = por %p58, %p59
      %p61 = scmp.ne.s32.totalorder %s53, %s56
      %p62 = scmp.eq.s32.totalorder %s31, 0
      %p63 = por %p61, %p62
      %p64 = scmp.ne.s32.totalorder %s53, %s56
      %p65 = scmp.eq.s32.totalorder %s36, 3
      %p66 = por %p64, %p65
      %p67 = scmp.ne.s32.totalorder %s56, %s57
      %p68 = scmp.eq.s32.totalorder %s36, 0
      %p69 = por %p67, %p68
      %p70 = scmp.ne.s32.totalorder %s56, %s57
      %p71 = scmp.eq.s32.totalorder %s37, 3
      %p72 = por %p70, %p71
      %p74 = scmp.ne.s32.totalorder %s57, %s73
      %p75 = scmp.eq.s32.totalorder %s37, 0
      %p76 = por %p74, %p75
      %s77 = ssub.s32 %s38, %s50
      %p78 = scmp.eq.s32.totalorder %s77, 0
      %s80 = sadd.s32 %s79, 1
      %s81 = scalar_select %p78, %s79, %s80
      %p84 = pneg %p78
      %p85 = scmp.eq.s32.totalorder %s31, 3
      %p86 = por %p84, %p85
      %p87 = scmp.ne.s32.totalorder %s79, %s82
      %p88 = scmp.eq.s32.totalorder %s31, 0
      %p89 = por %p87, %p88
      %p90 = scmp.ne.s32.totalorder %s79, %s82
      %p91 = scmp.eq.s32.totalorder %s36, 3
      %p92 = por %p90, %p91
      %p93 = scmp.ne.s32.totalorder %s82, %s83
      %p94 = scmp.eq.s32.totalorder %s36, 0
      %p95 = por %p93, %p94
      %p96 = scmp.ne.s32.totalorder %s82, %s83
      %p97 = scmp.eq.s32.totalorder %s37, 3
      %p98 = por %p96, %p97
      %p100 = scmp.ne.s32.totalorder %s83, %s99
      %p101 = scmp.eq.s32.totalorder %s37, 0
      %p102 = por %p100, %p101
      %s103 = ssub.s32 %s39, %s46
      %p104 = scmp.eq.s32.totalorder %s103, 0
      %s106 = sadd.s32 %s105, 1
      %s107 = scalar_select %p104, %s105, %s106
      %p110 = pneg %p104
      %p111 = scmp.eq.s32.totalorder %s31, 3
      %p112 = por %p110, %p111
      %p113 = scmp.ne.s32.totalorder %s105, %s108
      %p114 = scmp.eq.s32.totalorder %s31, 0
      %p115 = por %p113, %p114
      %p116 = scmp.ne.s32.totalorder %s105, %s108
      %p117 = scmp.eq.s32.totalorder %s36, 3
      %p118 = por %p116, %p117
      %p119 = scmp.ne.s32.totalorder %s108, %s109
      %p120 = scmp.eq.s32.totalorder %s36, 0
      %p121 = por %p119, %p120
      %p122 = scmp.ne.s32.totalorder %s108, %s109
      %p123 = scmp.eq.s32.totalorder %s37, 3
      %p124 = por %p122, %p123
      %p126 = scmp.ne.s32.totalorder %s109, %s125
      %p127 = scmp.eq.s32.totalorder %s37, 0
      %p128 = por %p126, %p127
      %s129 = ssub.s32 %s39, %s46
      %p130 = scmp.eq.s32.totalorder %s129, 0
      %s132 = sadd.s32 %s131, 1
      %s133 = scalar_select %p130, %s131, %s132
      %p136 = pneg %p130
      %p137 = scmp.eq.s32.totalorder %s31, 3
      %p138 = por %p136, %p137
      %p139 = scmp.ne.s32.totalorder %s131, %s134
      %p140 = scmp.eq.s32.totalorder %s31, 0
      %p141 = por %p139, %p140
      %p142 = scmp.ne.s32.totalorder %s131, %s134
      %p143 = scmp.eq.s32.totalorder %s36, 3
      %p144 = por %p142, %p143
      %p145 = scmp.ne.s32.totalorder %s134, %s135
      %p146 = scmp.eq.s32.totalorder %s36, 0
      %p147 = por %p145, %p146
      %p148 = scmp.ne.s32.totalorder %s134, %s135
      %p149 = scmp.eq.s32.totalorder %s37, 3
      %p150 = por %p148, %p149
      %p152 = scmp.ne.s32.totalorder %s135, %s151
      %p153 = scmp.eq.s32.totalorder %s37, 0
      %p154 = por %p152, %p153
      %s155 = ssub.s32 %s39, %s46
      %p156 = scmp.eq.s32.totalorder %s155, 0
      %s158 = sadd.s32 %s157, 1
      %s159 = scalar_select %p156, %s157, %s158
      %p162 = pneg %p156
      %p163 = scmp.eq.s32.totalorder %s31, 3
      %p164 = por %p162, %p163
      %p165 = scmp.ne.s32.totalorder %s157, %s160
      %p166 = scmp.eq.s32.totalorder %s31, 0
      %p167 = por %p165, %p166
      %p168 = scmp.ne.s32.totalorder %s157, %s160
      %p169 = scmp.eq.s32.totalorder %s36, 3
      %p170 = por %p168, %p169
      %p171 = scmp.ne.s32.totalorder %s160, %s161
      %p172 = scmp.eq.s32.totalorder %s36, 0
      %p173 = por %p171, %p172
      %p174 = scmp.ne.s32.totalorder %s160, %s161
      %p175 = scmp.eq.s32.totalorder %s37, 3
      %p176 = por %p174, %p175
      %p178 = scmp.ne.s32.totalorder %s161, %s177
      %p179 = scmp.eq.s32.totalorder %s37, 0
      %p180 = por %p178, %p179
      %s181 = ssub.s32 %s39, %s46
      %p182 = scmp.eq.s32.totalorder %s181, 0
      %s184 = sadd.s32 %s183, 1
      %s185 = scalar_select %p182, %s183, %s184
      %p188 = pneg %p182
      %p189 = scmp.eq.s32.totalorder %s31, 3
      %p190 = por %p188, %p189
      %p191 = scmp.ne.s32.totalorder %s183, %s186
      %p192 = scmp.eq.s32.totalorder %s31, 0
      %p193 = por %p191, %p192
      %p194 = scmp.ne.s32.totalorder %s183, %s186
      %p195 = scmp.eq.s32.totalorder %s36, 3
      %p196 = por %p194, %p195
      %p197 = scmp.ne.s32.totalorder %s186, %s187
      %p198 = scmp.eq.s32.totalorder %s36, 0
      %p199 = por %p197, %p198
      %p200 = scmp.ne.s32.totalorder %s186, %s187
      %p201 = scmp.eq.s32.totalorder %s37, 3
      %p202 = por %p200, %p201
      %p204 = scmp.ne.s32.totalorder %s187, %s203
      %p205 = scmp.eq.s32.totalorder %s37, 0
      %p206 = por %p204, %p205
      %s207 = ssub.s32 %s39, %s46
      %p208 = scmp.eq.s32.totalorder %s207, 0
      %s210 = sadd.s32 %s209, 1
      %s211 = scalar_select %p208, %s209, %s210
      %p214 = pneg %p208
      %p215 = scmp.eq.s32.totalorder %s31, 3
      %p216 = por %p214, %p215
      %p217 = scmp.ne.s32.totalorder %s209, %s212
      %p218 = scmp.eq.s32.totalorder %s31, 0
      %p219 = por %p217, %p218
      %p220 = scmp.ne.s32.totalorder %s209, %s212
      %p221 = scmp.eq.s32.totalorder %s36, 3
      %p222 = por %p220, %p221
      %p223 = scmp.ne.s32.totalorder %s212, %s213
      %p224 = scmp.eq.s32.totalorder %s36, 0
      %p225 = por %p223, %p224
      %p226 = scmp.ne.s32.totalorder %s212, %s213
      %p227 = scmp.eq.s32.totalorder %s37, 3
      %p228 = por %p226, %p227
      %p230 = scmp.ne.s32.totalorder %s213, %s229
      %p231 = scmp.eq.s32.totalorder %s37, 0
      %p232 = por %p230, %p231
      %s233 = ssub.s32 %s39, %s46
      %p234 = scmp.eq.s32.totalorder %s233, 0
      %s236 = sadd.s32 %s235, 1
      %s237 = scalar_select %p234, %s235, %s236
      %p240 = pneg %p234
      %p241 = scmp.eq.s32.totalorder %s31, 3
      %p242 = por %p240, %p241
      %p243 = scmp.ne.s32.totalorder %s235, %s238
      %p244 = scmp.eq.s32.totalorder %s31, 0
      %p245 = por %p243, %p244
      %p246 = scmp.ne.s32.totalorder %s235, %s238
      %p247 = scmp.eq.s32.totalorder %s36, 3
      %p248 = por %p246, %p247
      %p249 = scmp.ne.s32.totalorder %s238, %s239
      %p250 = scmp.eq.s32.totalorder %s36, 0
      %p251 = por %p249, %p250
      %p252 = scmp.ne.s32.totalorder %s238, %s239
      %p253 = scmp.eq.s32.totalorder %s37, 3
      %p254 = por %p252, %p253
      %p256 = scmp.ne.s32.totalorder %s239, %s255
      %p257 = scmp.eq.s32.totalorder %s37, 0
      %p258 = por %p256, %p257
      %s259 = ssub.s32 %s39, %s46
      %p260 = scmp.eq.s32.totalorder %s259, 0
      %s262 = sadd.s32 %s261, 1
      %s263 = scalar_select %p260, %s261, %s262
      %p266 = pneg %p260
      %p267 = scmp.eq.s32.totalorder %s31, 3
      %p268 = por %p266, %p267
      %p269 = scmp.ne.s32.totalorder %s261, %s264
      %p270 = scmp.eq.s32.totalorder %s31, 0
      %p271 = por %p269, %p270
      %p272 = scmp.ne.s32.totalorder %s261, %s264
      %p273 = scmp.eq.s32.totalorder %s36, 3
      %p274 = por %p272, %p273
      %p275 = scmp.ne.s32.totalorder %s264, %s265
      %p276 = scmp.eq.s32.totalorder %s36, 0
      %p277 = por %p275, %p276
      %p278 = scmp.ne.s32.totalorder %s264, %s265
      %p279 = scmp.eq.s32.totalorder %s37, 3
      %p280 = por %p278, %p279
      %p282 = scmp.ne.s32.totalorder %s265, %s281
      %p283 = scmp.eq.s32.totalorder %s37, 0
      %p284 = por %p282, %p283
      %s285 = ssub.s32 %s39, %s46
      %p286 = scmp.eq.s32.totalorder %s285, 0
      %s288 = sadd.s32 %s287, 1
      %s289 = scalar_select %p286, %s287, %s288
      %p292 = pneg %p286
      %p293 = scmp.eq.s32.totalorder %s31, 3
      %p294 = por %p292, %p293
      %p295 = scmp.ne.s32.totalorder %s287, %s290
      %p296 = scmp.eq.s32.totalorder %s31, 0
      %p297 = por %p295, %p296
      %p298 = scmp.ne.s32.totalorder %s287, %s290
      %p299 = scmp.eq.s32.totalorder %s36, 3
      %p300 = por %p298, %p299
      %p301 = scmp.ne.s32.totalorder %s290, %s291
      %p302 = scmp.eq.s32.totalorder %s36, 0
      %p303 = por %p301, %p302
      %p304 = scmp.ne.s32.totalorder %s290, %s291
      %p305 = scmp.eq.s32.totalorder %s37, 3
      %p306 = por %p304, %p305
      %p308 = scmp.ne.s32.totalorder %s291, %s307
      %p309 = scmp.eq.s32.totalorder %s37, 0
      %p310 = por %p308, %p309
      %s311 = ssub.s32 %s39, %s46
      %p312 = scmp.eq.s32.totalorder %s311, 0
      %s314 = sadd.s32 %s313, 1
      %s315 = scalar_select %p312, %s313, %s314
      %p318 = pneg %p312
      %p319 = scmp.eq.s32.totalorder %s31, 3
      %p320 = por %p318, %p319
      %p321 = scmp.ne.s32.totalorder %s313, %s316
      %p322 = scmp.eq.s32.totalorder %s31, 0
      %p323 = por %p321, %p322
      %p324 = scmp.ne.s32.totalorder %s313, %s316
      %p325 = scmp.eq.s32.totalorder %s36, 3
      %p326 = por %p324, %p325
      %p327 = scmp.ne.s32.totalorder %s316, %s317
      %p328 = scmp.eq.s32.totalorder %s36, 0
      %p329 = por %p327, %p328
      %p330 = scmp.ne.s32.totalorder %s316, %s317
      %p331 = scmp.eq.s32.totalorder %s37, 3
      %p332 = por %p330, %p331
      %p334 = scmp.ne.s32.totalorder %s317, %s333
      %p335 = scmp.eq.s32.totalorder %s37, 0
      %p336 = por %p334, %p335
      %s337 = ssub.s32 %s39, %s46
      %p338 = scmp.eq.s32.totalorder %s337, 0
      %s340 = sadd.s32 %s339, 1
      %s341 = scalar_select %p338, %s339, %s340
      %p344 = pneg %p338
      %p345 = scmp.eq.s32.totalorder %s31, 3
      %p346 = por %p344, %p345
      %p347 = scmp.ne.s32.totalorder %s339, %s342
      %p348 = scmp.eq.s32.totalorder %s31, 0
      %p349 = por %p347, %p348
      %p350 = scmp.ne.s32.totalorder %s339, %s342
      %p351 = scmp.eq.s32.totalorder %s36, 3
      %p352 = por %p350, %p351
      %p353 = scmp.ne.s32.totalorder %s342, %s343
      %p354 = scmp.eq.s32.totalorder %s36, 0
      %p355 = por %p353, %p354
      %p356 = scmp.ne.s32.totalorder %s342, %s343
      %p357 = scmp.eq.s32.totalorder %s37, 3
      %p358 = por %p356, %p357
      %p360 = scmp.ne.s32.totalorder %s343, %s359
      %p361 = scmp.eq.s32.totalorder %s37, 0
      %p362 = por %p360, %p361
      %s363 = ssub.s32 %s39, %s46
      %p364 = scmp.eq.s32.totalorder %s363, 0
      %s366 = sadd.s32 %s365, 1
      %s367 = scalar_select %p364, %s365, %s366
      %p370 = pneg %p364
      %p371 = scmp.eq.s32.totalorder %s31, 3
      %p372 = por %p370, %p371
      %p373 = scmp.ne.s32.totalorder %s365, %s368
      %p374 = scmp.eq.s32.totalorder %s31, 0
      %p375 = por %p373, %p374
      %p376 = scmp.ne.s32.totalorder %s365, %s368
      %p377 = scmp.eq.s32.totalorder %s36, 3
      %p378 = por %p376, %p377
      %p379 = scmp.ne.s32.totalorder %s368, %s369
      %p380 = scmp.eq.s32.totalorder %s36, 0
      %p381 = por %p379, %p380
      %p382 = scmp.ne.s32.totalorder %s368, %s369
      %p383 = scmp.eq.s32.totalorder %s37, 3
      %p384 = por %p382, %p383
      %p386 = scmp.ne.s32.totalorder %s369, %s385
      %p387 = scmp.eq.s32.totalorder %s37, 0
      %p388 = por %p386, %p387
      %s389 = ssub.s32 %s39, %s46
      %p390 = scmp.eq.s32.totalorder %s389, 0
      %s392 = sadd.s32 %s391, 1
      %s393 = scalar_select %p390, %s391, %s392
      %p396 = pneg %p390
      %p397 = scmp.eq.s32.totalorder %s31, 3
      %p398 = por %p396, %p397
      %p399 = scmp.ne.s32.totalorder %s391, %s394
      %p400 = scmp.eq.s32.totalorder %s31, 0
      %p401 = por %p399, %p400
      %p402 = scmp.ne.s32.totalorder %s391, %s394
      %p403 = scmp.eq.s32.totalorder %s36, 3
      %p404 = por %p402, %p403
      %p405 = scmp.ne.s32.totalorder %s394, %s395
      %p406 = scmp.eq.s32.totalorder %s36, 0
      %p407 = por %p405, %p406
      %p408 = scmp.ne.s32.totalorder %s394, %s395
      %p409 = scmp.eq.s32.totalorder %s37, 3
      %p410 = por %p408, %p409
      %p412 = scmp.ne.s32.totalorder %s395, %s411
      %p413 = scmp.eq.s32.totalorder %s37, 0
      %p414 = por %p412, %p413
      %s416 = sadd.s32 %s415, 1
      %p419 = scmp.eq.s32.totalorder %s31, 3
      %p420 = scmp.ne.s32.totalorder %s415, %s417
      %p421 = scmp.eq.s32.totalorder %s31, 0
      %p422 = por %p420, %p421
      %p423 = scmp.ne.s32.totalorder %s415, %s417
      %p424 = scmp.eq.s32.totalorder %s36, 3
      %p425 = por %p423, %p424
      %p426 = scmp.ne.s32.totalorder %s417, %s418
      %p427 = scmp.eq.s32.totalorder %s36, 0
      %p428 = por %p426, %p427
      %p429 = scmp.ne.s32.totalorder %s417, %s418
      %p430 = scmp.eq.s32.totalorder %s37, 3
      %p431 = por %p429, %p430
      %p433 = scmp.ne.s32.totalorder %s418, %s432
      %p434 = scmp.eq.s32.totalorder %s37, 0
      %p435 = por %p433, %p434
      %s437 = sadd.s32 %s436, 1
      %p440 = scmp.eq.s32.totalorder %s31, 3
      %p441 = scmp.ne.s32.totalorder %s436, %s438
      %p442 = scmp.eq.s32.totalorder %s31, 0
      %p443 = por %p441, %p442
      %p444 = scmp.ne.s32.totalorder %s436, %s438
      %p445 = scmp.eq.s32.totalorder %s36, 3
      %p446 = por %p444, %p445
      %p447 = scmp.ne.s32.totalorder %s438, %s439
      %p448 = scmp.eq.s32.totalorder %s36, 0
      %p449 = por %p447, %p448
      %p450 = scmp.ne.s32.totalorder %s438, %s439
      %p451 = scmp.eq.s32.totalorder %s37, 3
      %p452 = por %p450, %p451
      %p454 = scmp.ne.s32.totalorder %s439, %s453
      %p455 = scmp.eq.s32.totalorder %s37, 0
      %p456 = por %p454, %p455
      %s457 = ssub.s32 %s38, %s50
      %p458 = scmp.eq.s32.totalorder %s457, 0
      %s460 = sadd.s32 %s459, 1
      %s461 = scalar_select %p458, %s459, %s460
      %p464 = pneg %p458
      %p465 = scmp.eq.s32.totalorder %s31, 3
      %p466 = por %p464, %p465
      %p467 = scmp.ne.s32.totalorder %s459, %s462
      %p468 = scmp.eq.s32.totalorder %s31, 0
      %p469 = por %p467, %p468
      %p470 = scmp.ne.s32.totalorder %s459, %s462
      %p471 = scmp.eq.s32.totalorder %s36, 3
      %p472 = por %p470, %p471
      %p473 = scmp.ne.s32.totalorder %s462, %s463
      %p474 = scmp.eq.s32.totalorder %s36, 0
      %p475 = por %p473, %p474
      %p476 = scmp.ne.s32.totalorder %s462, %s463
      %p477 = scmp.eq.s32.totalorder %s37, 3
      %p478 = por %p476, %p477
      %p480 = scmp.ne.s32.totalorder %s463, %s479
      %p481 = scmp.eq.s32.totalorder %s37, 0
      %p482 = por %p480, %p481
      %p483 = scmp.le.s32.totalorder 1, %s31
      %p484 = scmp.lt.s32.totalorder %s31, 5
      %p485 = pnand %p483, %p484
      %p486 = pneg %p485
      // Predicated region
      $region9: #{tpu_custom_call.1} parent=5 // pred_check
        _
      $region10: #{tpu_custom_call.1} parent=5 // pred_check_branch
        %488 = sbr.rel (%p485) target = $region12
      $region11: #{tpu_custom_call.1} parent=5 // pred_region
        %s489 = ssub.s32 %s31, 1
        // Predicated region
        $region13: #{tpu_custom_call.1} parent=11 // pred_check
          %p490 = pneg %p428
        $region14: #{tpu_custom_call.1} parent=11 // pred_check_branch
          %492 = sbr.rel (%p490) target = $region16
        $region15: #{tpu_custom_call.1} parent=11 // pred_region
          _
        $region16: #{tpu_custom_call.1} parent=11 // pred_fallthru
          _
        // Predicated region
        $region17: #{tpu_custom_call.1} parent=11 // pred_check
          %p493 = pneg %p449
        $region18: #{tpu_custom_call.1} parent=11 // pred_check_branch
          %495 = sbr.rel (%p493) target = $region20
        $region19: #{tpu_custom_call.1} parent=11 // pred_region
          _
        $region20: #{tpu_custom_call.1} parent=11 // pred_fallthru
          _
      $region12: #{tpu_custom_call.1} parent=5 // pred_fallthru
        _
      %p496 = scmp.lt.s32.totalorder %s31, 4
      // Predicated region
      $region21: #{tpu_custom_call.1} parent=5 // pred_check
        %p497 = pneg %p496
      $region22: #{tpu_custom_call.1} parent=5 // pred_check_branch
        %499 = sbr.rel (%p497) target = $region24
      $region23: #{tpu_custom_call.1} parent=5 // pred_region
        // Predicated region
        $region25: #{tpu_custom_call.1} parent=23 // pred_check
          %p500 = pneg %p63
        $region26: #{tpu_custom_call.1} parent=23 // pred_check_branch
          %502 = sbr.rel (%p500) target = $region28
        $region27: #{tpu_custom_call.1} parent=23 // pred_region
          %s503 = sand.u32 %s53, 1
          %s504 = scalar_lea.sflag [#allocation5], %s503
          %s505 = sand.u32 %s53, 1
          %s506 = smul.addr %s505, 8
          %s507 = scalar_lea.vmem [#allocation4], %s506
          %s509 = ssub.s32 128, 128
          %510 = vsyncadd %s504, %s509
          %s511 = smul.addr %s38, 128
          %s512 = scalar_lea.hbm %s0, %s511
          %s514 = sshll.u32 %s507, 4
          %s515 = int_to_ptr.vmem [resolvable:$true] %s514
          %517 = dma.hbm_to_vmem [thread:$0]  %s512, 128, %s515, %s504
        $region28: #{tpu_custom_call.1} parent=23 // pred_fallthru
          _
        // Predicated region
        $region29: #{tpu_custom_call.1} parent=23 // pred_check
          %p518 = pneg %p89
        $region30: #{tpu_custom_call.1} parent=23 // pred_check_branch
          %520 = sbr.rel (%p518) target = $region32
        $region31: #{tpu_custom_call.1} parent=23 // pred_region
          %s521 = sand.u32 %s79, 1
          %s522 = scalar_lea.sflag [#allocation8], %s521
          %s523 = sand.u32 %s79, 1
          %s524 = scalar_lea.vmem [#allocation7], %s523
          %s526 = ssub.s32 16, 16
          %527 = vsyncadd %s522, %s526
          %s528 = smul.addr %s38, 16
          %s529 = scalar_lea.hbm %s1, %s528
          %s531 = sshll.u32 %s524, 4
          %s532 = int_to_ptr.vmem [resolvable:$true] %s531
          %534 = dma.hbm_to_vmem [thread:$0]  %s529, 16, %s532, %s522
        $region32: #{tpu_custom_call.1} parent=23 // pred_fallthru
          _
        // Predicated region
        $region33: #{tpu_custom_call.1} parent=23 // pred_check
          %p535 = pneg %p115
        $region34: #{tpu_custom_call.1} parent=23 // pred_check_branch
          %537 = sbr.rel (%p535) target = $region36
        $region35: #{tpu_custom_call.1} parent=23 // pred_region
          %p538 = scmp.lt.s32.totalorder %s39, 1
          %s539 = scalar_select %p538, %s39, 1
          %s540 = scalar_lea.vmem %s2, %s539
        $region36: #{tpu_custom_call.1} parent=23 // pred_fallthru
          _
        // Predicated region
        $region37: #{tpu_custom_call.1} parent=23 // pred_check
          %p541 = pneg %p141
        $region38: #{tpu_custom_call.1} parent=23 // pred_check_branch
          %543 = sbr.rel (%p541) target = $region40
        $region39: #{tpu_custom_call.1} parent=23 // pred_region
          %p544 = scmp.lt.s32.totalorder %s39, 1
          %s545 = scalar_select %p544, %s39, 1
          %s546 = scalar_lea.vmem %s3, %s545
        $region40: #{tpu_custom_call.1} parent=23 // pred_fallthru
          _
        // Predicated region
        $region41: #{tpu_custom_call.1} parent=23 // pred_check
          %p547 = pneg %p167
        $region42: #{tpu_custom_call.1} parent=23 // pred_check_branch
          %549 = sbr.rel (%p547) target = $region44
        $region43: #{tpu_custom_call.1} parent=23 // pred_region
          %p550 = scmp.lt.s32.totalorder %s39, 1
          %s551 = scalar_select %p550, %s39, 1
          %s552 = smul.addr %s551, 4
          %s553 = smul.addr %s552, 4
          %s554 = scalar_lea.vmem %s4, %s553
        $region44: #{tpu_custom_call.1} parent=23 // pred_fallthru
          _
        // Predicated region
        $region45: #{tpu_custom_call.1} parent=23 // pred_check
          %p555 = pneg %p193
        $region46: #{tpu_custom_call.1} parent=23 // pred_check_branch
          %557 = sbr.rel (%p555) target = $region48
        $region47: #{tpu_custom_call.1} parent=23 // pred_region
          %p558 = scmp.lt.s32.totalorder %s39, 1
          %s559 = scalar_select %p558, %s39, 1
          %s560 = scalar_lea.vmem %s5, %s559
        $region48: #{tpu_custom_call.1} parent=23 // pred_fallthru
          _
        // Predicated region
        $region49: #{tpu_custom_call.1} parent=23 // pred_check
          %p561 = pneg %p219
        $region50: #{tpu_custom_call.1} parent=23 // pred_check_branch
          %563 = sbr.rel (%p561) target = $region52
        $region51: #{tpu_custom_call.1} parent=23 // pred_region
          %p564 = scmp.lt.s32.totalorder %s39, 1
          %s565 = scalar_select %p564, %s39, 1
          %s566 = smul.addr %s565, 4
          %s567 = smul.addr %s566, 4
          %s568 = scalar_lea.vmem %s6, %s567
        $region52: #{tpu_custom_call.1} parent=23 // pred_fallthru
          _
        // Predicated region
        $region53: #{tpu_custom_call.1} parent=23 // pred_check
          %p569 = pneg %p245
        $region54: #{tpu_custom_call.1} parent=23 // pred_check_branch
          %571 = sbr.rel (%p569) target = $region56
        $region55: #{tpu_custom_call.1} parent=23 // pred_region
          %p572 = scmp.lt.s32.totalorder %s39, 1
          %s573 = scalar_select %p572, %s39, 1
          %s574 = scalar_lea.vmem %s7, %s573
        $region56: #{tpu_custom_call.1} parent=23 // pred_fallthru
          _
        // Predicated region
        $region57: #{tpu_custom_call.1} parent=23 // pred_check
          %p575 = pneg %p271
        $region58: #{tpu_custom_call.1} parent=23 // pred_check_branch
          %577 = sbr.rel (%p575) target = $region60
        $region59: #{tpu_custom_call.1} parent=23 // pred_region
          %p578 = scmp.lt.s32.totalorder %s39, 1
          %s579 = scalar_select %p578, %s39, 1
          %s580 = scalar_lea.vmem %s8, %s579
        $region60: #{tpu_custom_call.1} parent=23 // pred_fallthru
          _
        // Predicated region
        $region61: #{tpu_custom_call.1} parent=23 // pred_check
          %p581 = pneg %p297
        $region62: #{tpu_custom_call.1} parent=23 // pred_check_branch
          %583 = sbr.rel (%p581) target = $region64
        $region63: #{tpu_custom_call.1} parent=23 // pred_region
          %p584 = scmp.lt.s32.totalorder %s39, 1
          %s585 = scalar_select %p584, %s39, 1
          %s586 = scalar_lea.vmem %s9, %s585
        $region64: #{tpu_custom_call.1} parent=23 // pred_fallthru
          _
        // Predicated region
        $region65: #{tpu_custom_call.1} parent=23 // pred_check
          %p587 = pneg %p323
        $region66: #{tpu_custom_call.1} parent=23 // pred_check_branch
          %589 = sbr.rel (%p587) target = $region68
        $region67: #{tpu_custom_call.1} parent=23 // pred_region
          %p590 = scmp.lt.s32.totalorder %s39, 1
          %s591 = scalar_select %p590, %s39, 1
          %s592 = smul.addr %s591, 4
          %s593 = smul.addr %s592, 4
          %s594 = scalar_lea.vmem %s10, %s593
        $region68: #{tpu_custom_call.1} parent=23 // pred_fallthru
          _
        // Predicated region
        $region69: #{tpu_custom_call.1} parent=23 // pred_check
          %p595 = pneg %p349
        $region70: #{tpu_custom_call.1} parent=23 // pred_check_branch
          %597 = sbr.rel (%p595) target = $region72
        $region71: #{tpu_custom_call.1} parent=23 // pred_region
          %p598 = scmp.lt.s32.totalorder %s39, 1
          %s599 = scalar_select %p598, %s39, 1
          %s600 = scalar_lea.vmem %s11, %s599
        $region72: #{tpu_custom_call.1} parent=23 // pred_fallthru
          _
        // Predicated region
        $region73: #{tpu_custom_call.1} parent=23 // pred_check
          %p601 = pneg %p375
        $region74: #{tpu_custom_call.1} parent=23 // pred_check_branch
          %603 = sbr.rel (%p601) target = $region76
        $region75: #{tpu_custom_call.1} parent=23 // pred_region
          %p604 = scmp.lt.s32.totalorder %s39, 1
          %s605 = scalar_select %p604, %s39, 1
          %s606 = smul.addr %s605, 8
          %s607 = smul.addr %s606, 4
          %s608 = scalar_lea.vmem %s12, %s607
        $region76: #{tpu_custom_call.1} parent=23 // pred_fallthru
          _
        // Predicated region
        $region77: #{tpu_custom_call.1} parent=23 // pred_check
          %p609 = pneg %p401
        $region78: #{tpu_custom_call.1} parent=23 // pred_check_branch
          %611 = sbr.rel (%p609) target = $region80
        $region79: #{tpu_custom_call.1} parent=23 // pred_region
          %p612 = scmp.lt.s32.totalorder %s39, 1
          %s613 = scalar_select %p612, %s39, 1
          %s614 = scalar_lea.vmem %s13, %s613
        $region80: #{tpu_custom_call.1} parent=23 // pred_fallthru
          _
      $region24: #{tpu_custom_call.1} parent=5 // pred_fallthru
        _
      %p615 = scmp.le.s32.totalorder 1, %s31
      %p616 = scmp.lt.s32.totalorder %s31, 5
      %p617 = pnand %p615, %p616
      %p618 = pneg %p617
      // Predicated region
      $region81: #{tpu_custom_call.1} parent=5 // pred_check
        _
      $region82: #{tpu_custom_call.1} parent=5 // pred_check_branch
        %620 = sbr.rel (%p617) target = $region84
      $region83: #{tpu_custom_call.1} parent=5 // pred_region
        %s621 = ssub.s32 %s31, 1
        %s622 = sand.u32 %s56, 1
        %s623 = scalar_lea.sflag [#allocation5], %s622
        %s624 = sand.u32 %s56, 1
        %s625 = smul.addr %s624, 8
        %s626 = scalar_lea.vmem [#allocation4], %s625
        // Predicated region
        $region85: #{tpu_custom_call.1} parent=83 // pred_check
          %p627 = pneg %p69
        $region86: #{tpu_custom_call.1} parent=83 // pred_check_branch
          %629 = sbr.rel (%p627) target = $region88
        $region87: #{tpu_custom_call.1} parent=83 // pred_region
          %630 = dma.done %s623, 128
        $region88: #{tpu_custom_call.1} parent=83 // pred_fallthru
          _
        %s631 = sand.u32 %s82, 1
        %s632 = scalar_lea.sflag [#allocation8], %s631
        %s633 = sand.u32 %s82, 1
        %s634 = scalar_lea.vmem [#allocation7], %s633
        // Predicated region
        $region89: #{tpu_custom_call.1} parent=83 // pred_check
          %p635 = pneg %p95
        $region90: #{tpu_custom_call.1} parent=83 // pred_check_branch
          %637 = sbr.rel (%p635) target = $region92
        $region91: #{tpu_custom_call.1} parent=83 // pred_region
          %638 = dma.done %s632, 16
        $region92: #{tpu_custom_call.1} parent=83 // pred_fallthru
          _
        %s639 = sand.u32 %s56, 1
        %s640 = scalar_lea.sflag [#allocation5], %s639
        %s641 = sand.u32 %s56, 1
        %s642 = smul.addr %s641, 8
        %s643 = scalar_lea.vmem [#allocation4], %s642
        %p644 = pneg %p69
        %p645 = pneg %p66
        %s646 = sand.u32 %s82, 1
        %s647 = scalar_lea.sflag [#allocation8], %s646
        %s648 = sand.u32 %s82, 1
        %s649 = scalar_lea.vmem [#allocation7], %s648
        %p650 = pneg %p95
        %p651 = pneg %p92
        %p652 = scmp.lt.s32.totalorder %s41, 1
        %s653 = scalar_select %p652, %s41, 1
        %s654 = scalar_lea.vmem %s2, %s653
        %p655 = pneg %p121
        %p656 = pneg %p118
        %p657 = scmp.lt.s32.totalorder %s41, 1
        %s658 = scalar_select %p657, %s41, 1
        %s659 = scalar_lea.vmem %s3, %s658
        %p660 = pneg %p147
        %p661 = pneg %p144
        %p662 = scmp.lt.s32.totalorder %s41, 1
        %s663 = scalar_select %p662, %s41, 1
        %s664 = smul.addr %s663, 4
        %s665 = smul.addr %s664, 4
        %s666 = scalar_lea.vmem %s4, %s665
        %p667 = pneg %p173
        %p668 = pneg %p170
        %p669 = scmp.lt.s32.totalorder %s41, 1
        %s670 = scalar_select %p669, %s41, 1
        %s671 = scalar_lea.vmem %s5, %s670
        %p672 = pneg %p199
        %p673 = pneg %p196
        %p674 = scmp.lt.s32.totalorder %s41, 1
        %s675 = scalar_select %p674, %s41, 1
        %s676 = smul.addr %s675, 4
        %s677 = smul.addr %s676, 4
        %s678 = scalar_lea.vmem %s6, %s677
        %p679 = pneg %p225
        %p680 = pneg %p222
        %p681 = scmp.lt.s32.totalorder %s41, 1
        %s682 = scalar_select %p681, %s41, 1
        %s683 = scalar_lea.vmem %s7, %s682
        %p684 = pneg %p251
        %p685 = pneg %p248
        %p686 = scmp.lt.s32.totalorder %s41, 1
        %s687 = scalar_select %p686, %s41, 1
        %s688 = scalar_lea.vmem %s8, %s687
        %p689 = pneg %p277
        %p690 = pneg %p274
        %p691 = scmp.lt.s32.totalorder %s41, 1
        %s692 = scalar_select %p691, %s41, 1
        %s693 = scalar_lea.vmem %s9, %s692
        %p694 = pneg %p303
        %p695 = pneg %p300
        %p696 = scmp.lt.s32.totalorder %s41, 1
        %s697 = scalar_select %p696, %s41, 1
        %s698 = smul.addr %s697, 4
        %s699 = smul.addr %s698, 4
        %s700 = scalar_lea.vmem %s10, %s699
        %p701 = pneg %p329
        %p702 = pneg %p326
        %p703 = scmp.lt.s32.totalorder %s41, 1
        %s704 = scalar_select %p703, %s41, 1
        %s705 = scalar_lea.vmem %s11, %s704
        %p706 = pneg %p355
        %p707 = pneg %p352
        %p708 = scmp.lt.s32.totalorder %s41, 1
        %s709 = scalar_select %p708, %s41, 1
        %s710 = smul.addr %s709, 8
        %s711 = smul.addr %s710, 4
        %s712 = scalar_lea.vmem %s12, %s711
        %p713 = pneg %p381
        %p714 = pneg %p378
        %p715 = scmp.lt.s32.totalorder %s41, 1
        %s716 = scalar_select %p715, %s41, 1
        %s717 = scalar_lea.vmem %s13, %s716
        %p718 = pneg %p407
        %p719 = pneg %p404
        %p720 = pneg %p428
        %p721 = pneg %p425
        %p722 = pneg %p449
        %p723 = pneg %p446
        %p724 = pneg %p475
        %p725 = pneg %p472
        %s726 = sand.u32 %s462, 1
        %s727 = scalar_lea.sflag [#allocation6], %s726
        %s728 = sand.u32 %s462, 1
        %s729 = smul.addr %s728, 8
        %s730 = scalar_lea.vmem [#allocation9], %s729
        %p731 = scmp.lt.s32.totalorder %s41, 1
        %s732 = scalar_select %p731, %s41, 1
        %s733 = scalar_lea.vmem %s2, %s732
        %p734 = scmp.lt.s32.totalorder %s41, 1
        %s735 = scalar_select %p734, %s41, 1
        %s736 = scalar_lea.vmem %s3, %s735
        %p737 = scmp.lt.s32.totalorder %s41, 1
        %s738 = scalar_select %p737, %s41, 1
        %s739 = smul.addr %s738, 4
        %s740 = smul.addr %s739, 4
        %s741 = scalar_lea.vmem %s4, %s740
        %p742 = scmp.lt.s32.totalorder %s41, 1
        %s743 = scalar_select %p742, %s41, 1
        %s744 = scalar_lea.vmem %s5, %s743
        %p745 = scmp.lt.s32.totalorder %s41, 1
        %s746 = scalar_select %p745, %s41, 1
        %s747 = smul.addr %s746, 4
        %s748 = smul.addr %s747, 4
        %s749 = scalar_lea.vmem %s6, %s748
        %p750 = scmp.lt.s32.totalorder %s41, 1
        %s751 = scalar_select %p750, %s41, 1
        %s752 = scalar_lea.vmem %s7, %s751
        %p753 = scmp.lt.s32.totalorder %s41, 1
        %s754 = scalar_select %p753, %s41, 1
        %s755 = scalar_lea.vmem %s8, %s754
        %p756 = scmp.lt.s32.totalorder %s41, 1
        %s757 = scalar_select %p756, %s41, 1
        %s758 = scalar_lea.vmem %s9, %s757
        %p759 = scmp.lt.s32.totalorder %s41, 1
        %s760 = scalar_select %p759, %s41, 1
        %s761 = smul.addr %s760, 4
        %s762 = smul.addr %s761, 4
        %s763 = scalar_lea.vmem %s10, %s762
        %p764 = scmp.lt.s32.totalorder %s41, 1
        %s765 = scalar_select %p764, %s41, 1
        %s766 = scalar_lea.vmem %s11, %s765
        %p767 = scmp.lt.s32.totalorder %s41, 1
        %s768 = scalar_select %p767, %s41, 1
        %s769 = smul.addr %s768, 8
        %s770 = smul.addr %s769, 4
        %s771 = scalar_lea.vmem %s12, %s770
        %p772 = scmp.lt.s32.totalorder %s41, 1
        %s773 = scalar_select %p772, %s41, 1
        %s774 = scalar_lea.vmem %s13, %s773
        %p776 = scmp.eq.s32.totalorder %s41, 0
        // Predicated region
        $region93: #{tpu_custom_call.1} parent=83 // pred_check
          %p777 = pneg %p776
        $region94: #{tpu_custom_call.1} parent=83 // pred_check_branch
          %779 = sbr.rel (%p777) target = $region96
        $region95: #{tpu_custom_call.1} parent=83 // pred_region
          %v780 = vld [vmem:[%s626] sm:$0xff]
          %vm781 = vcmask 261120
          %782 = vst.msk [vmem:[#allocation2] sm:$0xff] %vm781, %v780
        $region96: #{tpu_custom_call.1} parent=83 // pred_fallthru
          _
        %v783 = vld [vmem:[#allocation2] sm:$0xff]
        %v784 = vld [vmem:[%s634] sm:$0x1]
        %v785 = vld [vmem:[%s733] sm:$0x1]
        %v786 = vld [vmem:[%s736] sm:$0x1]
        %vm787 = vcmask 261120
        %v788 = vsel %vm787, %v783, 0.0
        %789 = vadd.xlane.f32.xlu0 %v788
        %v790 = vpop.xlane.xlu0 %789
        %v791 = vrcp.pop 32.0
        %v792 = vmul.f32 %v790, %v791
        %v793 = vsub.f32 %v783, %v792
        %v794 = vmul.f32 %v793, %v793
        %v795 = vsel %vm787, %v794, 0.0
        %796 = vadd.xlane.f32.xlu0 %v795
        %v797 = vpop.xlane.xlu0 %796
        %v798 = vmul.f32 %v797, 0.032258064
        %v799 = vrsqrt.pop %v798
        %v800 = vmul.f32 %v798, %v799
        %vm801 = vcmp.eq.f32.partialorder %v798, inf
        %v802 = vsel %vm801, %v798, %v800
        %vm803 = vcmp.eq.f32.partialorder %v798, 0.0
        %v804 = vand.u32 %v798, 2147483648
        %v805 = vsel %vm803, %v804, %v802
        %v806 = vadd.f32 %v805, 1e-06
        %v807 = vrcp.pop %v806
        %v808 = vmul.f32 %v793, %v807
        %v810 = vlaneseq
        %v811 = vshrl.u32 %v810, 7
        %v812 = vsub.s32 0, %v811
        %v813 = vrot.slane %v785, %v812
        %v815 = vmul.f32 %v813, %v808
        %v817 = vlaneseq
        %v818 = vshrl.u32 %v817, 7
        %v819 = vsub.s32 0, %v818
        %v820 = vrot.slane %v786, %v819
        %v822 = vadd.f32 %v815, %v820
        %v823 = vpack.c.bf16 %v822, %v822
        %v824 = vld [vmem:[%s741] sm:$0xf]
        %v825 = vld [vmem:[%s741 + $0x4] sm:$0xf]
        %v826 = vld [vmem:[%s741 + $0x8] sm:$0xf]
        %v827 = vld [vmem:[%s741 + $0xc] sm:$0xf]
        %v828 = vld [vmem:[%s744] sm:$0x1]
        %v830 = vlaneseq
        %v831 = vshrl.u32 %v830, 7
        %v832 = vsub.s32 0, %v831
        %v833 = vrot.slane %v828, %v832
        %v839 = vunpack.c.l.b16 %v824
        %v840 = vunpack.c.l.b16 %v825
        %v841 = vunpack.c.l.b16 %v826
        %v842 = vunpack.c.l.b16 %v827
        %v843 = vpack.c.b16 %v840, %v839
        %v844 = vpack.c.b16 %v842, %v841
        %v848 = vsel %vm787, %v823, 0
        %850 = vmatprep.subr.bf16.mxu0 0
        %851 = vmatpush1.bf16.msra.mxu0 0
        %852 = vmatprep.subr.bf16.mxu0 0
        %853 = vmatpush1.bf16.msra.mxu0 0
        %854 = vmatprep.subr.bf16.mxu0 0
        %855 = vmatpush1.bf16.msra.mxu0 0
        %856 = vmatprep.subr.bf16.mxu0 0
        %857 = vmatpush1.bf16.msra.mxu0 0
        %858 = vmatprep.subr.bf16.mxu0 0
        %859 = vmatpush1.bf16.msra.mxu0 0
        %860 = vmatprep.subr.bf16.mxu0 0
        %861 = vmatpush1.bf16.msra.mxu0 0
        %862 = vmatprep.subr.bf16.mxu0 0
        %863 = vmatpush1.bf16.msra.mxu0 %v844
        %864 = vmatprep.subr.bf16.mxu0 0
        %865 = vmatpush1.bf16.msra.mxu0 %v843
        %866 = vmatprep.subr.bf16.mxu0 0
        %867 = vmatpush2.bf16.msra.mxu0 0
        %868 = vmatprep.subr.bf16.mxu0 0
        %869 = vmatpush2.bf16.msra.mxu0 0
        %870 = vmatprep.subr.bf16.mxu0 0
        %871 = vmatpush2.bf16.msra.mxu0 0
        %872 = vmatprep.subr.bf16.mxu0 0
        %873 = vmatpush2.bf16.msra.mxu0 0
        %874 = vmatprep.subr.bf16.mxu0 0
        %875 = vmatpush2.bf16.msra.mxu0 0
        %876 = vmatprep.subr.bf16.mxu0 0
        %877 = vmatpush2.bf16.msra.mxu0 0
        %878 = vmatprep.subr.bf16.mxu0 0
        %879 = vmatpush2.bf16.msra.mxu0 0
        %880 = vmatprep.subr.bf16.mxu0 0
        %881 = vmatpush2.bf16.msra.mxu0 0
        %882 = vmatprep.mubr.bf16.mxu0 0
        %883 = vmatmul.mubr.bf16.gmra.mxu0 %v848
        %v884 = vpop.f32.mrf.mxu0
        %v885 = vadd.f32 %v833, %v884
        %v886 = vpop.f32.mrf.mxu0
        %v887 = vpop.f32.mrf.mxu0
        %v888 = vpop.f32.mrf.mxu0
        %889 = vdwg.mxu0
        %v890 = vpack.c.bf16 %v885, %v885
        %892 = vrot.lane.b32.xlu0 %v890, 96
        %v893 = vpop.permute.xlu0 %892
        %vm894 = vcmask 64512
        %v896 = vsel %vm894, %v890, 0
        %v899 = vsel %vm894, %v893, 0
        %901 = vmatprep.subr.bf16.mxu0 0
        %902 = vmatpush1.bf16.xpose.msra.mxu0 0
        %903 = vmatprep.subr.bf16.mxu0 0
        %904 = vmatpush1.bf16.xpose.msra.mxu0 0
        %905 = vmatprep.subr.bf16.mxu0 0
        %906 = vmatpush1.bf16.xpose.msra.mxu0 0
        %907 = vmatprep.subr.bf16.mxu0 0
        %908 = vmatpush1.bf16.xpose.msra.mxu0 0
        %909 = vmatprep.subr.bf16.mxu0 0
        %910 = vmatpush1.bf16.xpose.msra.mxu0 0
        %911 = vmatprep.subr.bf16.mxu0 0
        %912 = vmatpush1.bf16.xpose.msra.mxu0 0
        %913 = vmatprep.subr.bf16.mxu0 0
        %914 = vmatpush1.bf16.xpose.msra.mxu0 0
        %915 = vmatprep.subr.bf16.mxu0 0
        %916 = vmatpush1.bf16.xpose.msra.mxu0 %v899
        %917 = vmatprep.subr.bf16.mxu0 0
        %918 = vmatpush2.bf16.xpose.msra.mxu0 0
        %919 = vmatprep.subr.bf16.mxu0 0
        %920 = vmatpush2.bf16.xpose.msra.mxu0 0
        %921 = vmatprep.subr.bf16.mxu0 0
        %922 = vmatpush2.bf16.xpose.msra.mxu0 0
        %923 = vmatprep.subr.bf16.mxu0 0
        %924 = vmatpush2.bf16.xpose.msra.mxu0 0
        %925 = vmatprep.subr.bf16.mxu0 0
        %926 = vmatpush2.bf16.xpose.msra.mxu0 0
        %927 = vmatprep.subr.bf16.mxu0 0
        %928 = vmatpush2.bf16.xpose.msra.mxu0 0
        %929 = vmatprep.subr.bf16.mxu0 0
        %930 = vmatpush2.bf16.xpose.msra.mxu0 0
        %931 = vmatprep.subr.bf16.mxu0 0
        %932 = vmatpush2.bf16.xpose.msra.mxu0 0
        %933 = vmatprep.mubr.bf16.mxu0 0
        %934 = vmatmul.mubr.bf16.gmra.mxu0 %v896
        %v935 = vpop.f32.mrf.mxu0
        %v936 = vadd.f32 0.0, %v935
        %v937 = vpop.f32.mrf.mxu0
        %v938 = vpop.f32.mrf.mxu0
        %v939 = vpop.f32.mrf.mxu0
        %940 = vdwg.mxu0
        %v941 = vmul.f32 %v936, 0.35355338
        %vm942 = vcmp.eq.f32.partialorder %v784, 0.0
        %v943 = vsel %vm942, 1, 0
        %v944 = vlaneseq
        %v945 = vshrl.u32 %v944, 7
        %v946 = vsub.s32 0, %v945
        %v947 = vrot.slane %v943, %v946
        %vm948 = vcmp.eq.s32.totalorder %v947, 1
        %v949 = vsel %vm948, -1e+09, %v941
        %v950 = vsel %vm894, %v949, -inf
        %951 = vmax.xlane.f32.xlu0 %v950
        %v952 = vpop.xlane.xlu0 %951
        %v953 = vsub.f32 %v949, %v952
        %v954 = vmul.f32 %v953, 1.442695
        %v955 = vpow.pop %v954
        %v956 = vsel %vm894, %v955, 0.0
        %957 = vadd.xlane.f32.xlu0 %v956
        %v958 = vpop.xlane.xlu0 %957
        %v959 = vrcp.pop %v958
        %v960 = vmul.f32 %v955, %v959
        %v961 = vpack.c.bf16 %v960, %v960
        %962 = vrot.lane.b32.xlu0 %v890, 64
        %v963 = vpop.permute.xlu0 %962
        %v965 = vsel %vm894, %v961, 0
        %vm967 = vcmask 1043456
        %v969 = vsel %vm967, %v963, 0
        %971 = vmatprep.subr.bf16.mxu0 0
        %972 = vmatpush1.bf16.msra.mxu0 0
        %973 = vmatprep.subr.bf16.mxu0 0
        %974 = vmatpush1.bf16.msra.mxu0 0
        %975 = vmatprep.subr.bf16.mxu0 0
        %976 = vmatpush1.bf16.msra.mxu0 0
        %977 = vmatprep.subr.bf16.mxu0 0
        %978 = vmatpush1.bf16.msra.mxu0 0
        %979 = vmatprep.subr.bf16.mxu0 0
        %980 = vmatpush1.bf16.msra.mxu0 0
        %981 = vmatprep.subr.bf16.mxu0 0
        %982 = vmatpush1.bf16.msra.mxu0 0
        %983 = vmatprep.subr.bf16.mxu0 0
        %984 = vmatpush1.bf16.msra.mxu0 0
        %985 = vmatprep.subr.bf16.mxu0 0
        %986 = vmatpush1.bf16.msra.mxu0 %v969
        %987 = vmatprep.subr.bf16.mxu0 0
        %988 = vmatpush2.bf16.msra.mxu0 0
        %989 = vmatprep.subr.bf16.mxu0 0
        %990 = vmatpush2.bf16.msra.mxu0 0
        %991 = vmatprep.subr.bf16.mxu0 0
        %992 = vmatpush2.bf16.msra.mxu0 0
        %993 = vmatprep.subr.bf16.mxu0 0
        %994 = vmatpush2.bf16.msra.mxu0 0
        %995 = vmatprep.subr.bf16.mxu0 0
        %996 = vmatpush2.bf16.msra.mxu0 0
        %997 = vmatprep.subr.bf16.mxu0 0
        %998 = vmatpush2.bf16.msra.mxu0 0
        %999 = vmatprep.subr.bf16.mxu0 0
        %1000 = vmatpush2.bf16.msra.mxu0 0
        %1001 = vmatprep.subr.bf16.mxu0 0
        %1002 = vmatpush2.bf16.msra.mxu0 0
        %1003 = vmatprep.mubr.bf16.mxu0 0
        %1004 = vmatmul.mubr.bf16.gmra.mxu0 %v965
        %v1005 = vpop.f32.mrf.mxu0
        %v1006 = vadd.f32 0.0, %v1005
        %v1007 = vpop.f32.mrf.mxu0
        %v1008 = vpop.f32.mrf.mxu0
        %v1009 = vpop.f32.mrf.mxu0
        %1010 = vdwg.mxu0
        %1011 = vst.msk [vmem:[#allocation3] sm:$0xff] %vm894, %v1006
        %1012 = vrot.lane.b32.xlu0 %v890, 120
        %v1013 = vpop.permute.xlu0 %1012
        %1014 = vrot.lane.b32.xlu0 %v890, 88
        %v1015 = vpop.permute.xlu0 %1014
        %v1017 = vsel %vm894, %v1013, 0
        %v1020 = vsel %vm894, %v1015, 0
        %1022 = vmatprep.subr.bf16.mxu0 0
        %1023 = vmatpush1.bf16.xpose.msra.mxu0 0
        %1024 = vmatprep.subr.bf16.mxu0 0
        %1025 = vmatpush1.bf16.xpose.msra.mxu0 0
        %1026 = vmatprep.subr.bf16.mxu0 0
        %1027 = vmatpush1.bf16.xpose.msra.mxu0 0
        %1028 = vmatprep.subr.bf16.mxu0 0
        %1029 = vmatpush1.bf16.xpose.msra.mxu0 0
        %1030 = vmatprep.subr.bf16.mxu0 0
        %1031 = vmatpush1.bf16.xpose.msra.mxu0 0
        %1032 = vmatprep.subr.bf16.mxu0 0
        %1033 = vmatpush1.bf16.xpose.msra.mxu0 0
        %1034 = vmatprep.subr.bf16.mxu0 0
        %1035 = vmatpush1.bf16.xpose.msra.mxu0 0
        %1036 = vmatprep.subr.bf16.mxu0 0
        %1037 = vmatpush1.bf16.xpose.msra.mxu0 %v1020
        %1038 = vmatprep.subr.bf16.mxu0 0
        %1039 = vmatpush2.bf16.xpose.msra.mxu0 0
        %1040 = vmatprep.subr.bf16.mxu0 0
        %1041 = vmatpush2.bf16.xpose.msra.mxu0 0
        %1042 = vmatprep.subr.bf16.mxu0 0
        %1043 = vmatpush2.bf16.xpose.msra.mxu0 0
        %1044 = vmatprep.subr.bf16.mxu0 0
        %1045 = vmatpush2.bf16.xpose.msra.mxu0 0
        %1046 = vmatprep.subr.bf16.mxu0 0
        %1047 = vmatpush2.bf16.xpose.msra.mxu0 0
        %1048 = vmatprep.subr.bf16.mxu0 0
        %1049 = vmatpush2.bf16.xpose.msra.mxu0 0
        %1050 = vmatprep.subr.bf16.mxu0 0
        %1051 = vmatpush2.bf16.xpose.msra.mxu0 0
        %1052 = vmatprep.subr.bf16.mxu0 0
        %1053 = vmatpush2.bf16.xpose.msra.mxu0 0
        %1054 = vmatprep.mubr.bf16.mxu0 0
        %1055 = vmatmul.mubr.bf16.gmra.mxu0 %v1017
        %v1056 = vpop.f32.mrf.mxu0
        %v1057 = vadd.f32 0.0, %v1056
        %v1058 = vpop.f32.mrf.mxu0
        %v1059 = vpop.f32.mrf.mxu0
        %v1060 = vpop.f32.mrf.mxu0
        %1061 = vdwg.mxu0
        %v1062 = vmul.f32 %v1057, 0.35355338
        %v1063 = vsel %vm948, -1e+09, %v1062
        %v1064 = vsel %vm894, %v1063, -inf
        %1065 = vmax.xlane.f32.xlu0 %v1064
        %v1066 = vpop.xlane.xlu0 %1065
        %v1067 = vsub.f32 %v1063, %v1066
        %v1068 = vmul.f32 %v1067, 1.442695
        %v1069 = vpow.pop %v1068
        %v1070 = vsel %vm894, %v1069, 0.0
        %1071 = vadd.xlane.f32.xlu0 %v1070
        %v1072 = vpop.xlane.xlu0 %1071
        %v1073 = vrcp.pop %v1072
        %v1074 = vmul.f32 %v1069, %v1073
        %v1075 = vpack.c.bf16 %v1074, %v1074
        %1076 = vrot.lane.b32.xlu0 %v890, 56
        %v1077 = vpop.permute.xlu0 %1076
        %v1079 = vsel %vm894, %v1075, 0
        %v1082 = vsel %vm967, %v1077, 0
        %1084 = vmatprep.subr.bf16.mxu0 0
        %1085 = vmatpush1.bf16.msra.mxu0 0
        %1086 = vmatprep.subr.bf16.mxu0 0
        %1087 = vmatpush1.bf16.msra.mxu0 0
        %1088 = vmatprep.subr.bf16.mxu0 0
        %1089 = vmatpush1.bf16.msra.mxu0 0
        %1090 = vmatprep.subr.bf16.mxu0 0
        %1091 = vmatpush1.bf16.msra.mxu0 0
        %1092 = vmatprep.subr.bf16.mxu0 0
        %1093 = vmatpush1.bf16.msra.mxu0 0
        %1094 = vmatprep.subr.bf16.mxu0 0
        %1095 = vmatpush1.bf16.msra.mxu0 0
        %1096 = vmatprep.subr.bf16.mxu0 0
        %1097 = vmatpush1.bf16.msra.mxu0 0
        %1098 = vmatprep.subr.bf16.mxu0 0
        %1099 = vmatpush1.bf16.msra.mxu0 %v1082
        %1100 = vmatprep.subr.bf16.mxu0 0
        %1101 = vmatpush2.bf16.msra.mxu0 0
        %1102 = vmatprep.subr.bf16.mxu0 0
        %1103 = vmatpush2.bf16.msra.mxu0 0
        %1104 = vmatprep.subr.bf16.mxu0 0
        %1105 = vmatpush2.bf16.msra.mxu0 0
        %1106 = vmatprep.subr.bf16.mxu0 0
        %1107 = vmatpush2.bf16.msra.mxu0 0
        %1108 = vmatprep.subr.bf16.mxu0 0
        %1109 = vmatpush2.bf16.msra.mxu0 0
        %1110 = vmatprep.subr.bf16.mxu0 0
        %1111 = vmatpush2.bf16.msra.mxu0 0
        %1112 = vmatprep.subr.bf16.mxu0 0
        %1113 = vmatpush2.bf16.msra.mxu0 0
        %1114 = vmatprep.subr.bf16.mxu0 0
        %1115 = vmatpush2.bf16.msra.mxu0 0
        %1116 = vmatprep.mubr.bf16.mxu0 0
        %1117 = vmatmul.mubr.bf16.gmra.mxu0 %v1079
        %v1118 = vpop.f32.mrf.mxu0
        %v1119 = vadd.f32 0.0, %v1118
        %v1120 = vpop.f32.mrf.mxu0
        %v1121 = vpop.f32.mrf.mxu0
        %v1122 = vpop.f32.mrf.mxu0
        %1123 = vdwg.mxu0
        %1125 = vrot.lane.b32.xlu0 %v1119, 8
        %v1126 = vpop.permute.xlu0 %1125
        %vm1128 = vcmask 130112
        %1129 = vst.msk [vmem:[#allocation3] sm:$0xff] %vm1128, %v1126
        %1130 = vrot.lane.b32.xlu0 %v890, 112
        %v1131 = vpop.permute.xlu0 %1130
        %1132 = vrot.lane.b32.xlu0 %v890, 80
        %v1133 = vpop.permute.xlu0 %1132
        %v1135 = vsel %vm894, %v1131, 0
        %v1138 = vsel %vm894, %v1133, 0
        %1140 = vmatprep.subr.bf16.mxu0 0
        %1141 = vmatpush1.bf16.xpose.msra.mxu0 0
        %1142 = vmatprep.subr.bf16.mxu0 0
        %1143 = vmatpush1.bf16.xpose.msra.mxu0 0
        %1144 = vmatprep.subr.bf16.mxu0 0
        %1145 = vmatpush1.bf16.xpose.msra.mxu0 0
        %1146 = vmatprep.subr.bf16.mxu0 0
        %1147 = vmatpush1.bf16.xpose.msra.mxu0 0
        %1148 = vmatprep.subr.bf16.mxu0 0
        %1149 = vmatpush1.bf16.xpose.msra.mxu0 0
        %1150 = vmatprep.subr.bf16.mxu0 0
        %1151 = vmatpush1.bf16.xpose.msra.mxu0 0
        %1152 = vmatprep.subr.bf16.mxu0 0
        %1153 = vmatpush1.bf16.xpose.msra.mxu0 0
        %1154 = vmatprep.subr.bf16.mxu0 0
        %1155 = vmatpush1.bf16.xpose.msra.mxu0 %v1138
        %1156 = vmatprep.subr.bf16.mxu0 0
        %1157 = vmatpush2.bf16.xpose.msra.mxu0 0
        %1158 = vmatprep.subr.bf16.mxu0 0
        %1159 = vmatpush2.bf16.xpose.msra.mxu0 0
        %1160 = vmatprep.subr.bf16.mxu0 0
        %1161 = vmatpush2.bf16.xpose.msra.mxu0 0
        %1162 = vmatprep.subr.bf16.mxu0 0
        %1163 = vmatpush2.bf16.xpose.msra.mxu0 0
        %1164 = vmatprep.subr.bf16.mxu0 0
        %1165 = vmatpush2.bf16.xpose.msra.mxu0 0
        %1166 = vmatprep.subr.bf16.mxu0 0
        %1167 = vmatpush2.bf16.xpose.msra.mxu0 0
        %1168 = vmatprep.subr.bf16.mxu0 0
        %1169 = vmatpush2.bf16.xpose.msra.mxu0 0
        %1170 = vmatprep.subr.bf16.mxu0 0
        %1171 = vmatpush2.bf16.xpose.msra.mxu0 0
        %1172 = vmatprep.mubr.bf16.mxu0 0
        %1173 = vmatmul.mubr.bf16.gmra.mxu0 %v1135
        %v1174 = vpop.f32.mrf.mxu0
        %v1175 = vadd.f32 0.0, %v1174
        %v1176 = vpop.f32.mrf.mxu0
        %v1177 = vpop.f32.mrf.mxu0
        %v1178 = vpop.f32.mrf.mxu0
        %1179 = vdwg.mxu0
        %v1180 = vmul.f32 %v1175, 0.35355338
        %v1181 = vsel %vm948, -1e+09, %v1180
        %v1182 = vsel %vm894, %v1181, -inf
        %1183 = vmax.xlane.f32.xlu0 %v1182
        %v1184 = vpop.xlane.xlu0 %1183
        %v1185 = vsub.f32 %v1181, %v1184
        %v1186 = vmul.f32 %v1185, 1.442695
        %v1187 = vpow.pop %v1186
        %v1188 = vsel %vm894, %v1187, 0.0
        %1189 = vadd.xlane.f32.xlu0 %v1188
        %v1190 = vpop.xlane.xlu0 %1189
        %v1191 = vrcp.pop %v1190
        %v1192 = vmul.f32 %v1187, %v1191
        %v1193 = vpack.c.bf16 %v1192, %v1192
        %1194 = vrot.lane.b32.xlu0 %v890, 48
        %v1195 = vpop.permute.xlu0 %1194
        %v1197 = vsel %vm894, %v1193, 0
        %v1200 = vsel %vm967, %v1195, 0
        %1202 = vmatprep.subr.bf16.mxu0 0
        %1203 = vmatpush1.bf16.msra.mxu0 0
        %1204 = vmatprep.subr.bf16.mxu0 0
        %1205 = vmatpush1.bf16.msra.mxu0 0
        %1206 = vmatprep.subr.bf16.mxu0 0
        %1207 = vmatpush1.bf16.msra.mxu0 0
        %1208 = vmatprep.subr.bf16.mxu0 0
        %1209 = vmatpush1.bf16.msra.mxu0 0
        %1210 = vmatprep.subr.bf16.mxu0 0
        %1211 = vmatpush1.bf16.msra.mxu0 0
        %1212 = vmatprep.subr.bf16.mxu0 0
        %1213 = vmatpush1.bf16.msra.mxu0 0
        %1214 = vmatprep.subr.bf16.mxu0 0
        %1215 = vmatpush1.bf16.msra.mxu0 0
        %1216 = vmatprep.subr.bf16.mxu0 0
        %1217 = vmatpush1.bf16.msra.mxu0 %v1200
        %1218 = vmatprep.subr.bf16.mxu0 0
        %1219 = vmatpush2.bf16.msra.mxu0 0
        %1220 = vmatprep.subr.bf16.mxu0 0
        %1221 = vmatpush2.bf16.msra.mxu0 0
        %1222 = vmatprep.subr.bf16.mxu0 0
        %1223 = vmatpush2.bf16.msra.mxu0 0
        %1224 = vmatprep.subr.bf16.mxu0 0
        %1225 = vmatpush2.bf16.msra.mxu0 0
        %1226 = vmatprep.subr.bf16.mxu0 0
        %1227 = vmatpush2.bf16.msra.mxu0 0
        %1228 = vmatprep.subr.bf16.mxu0 0
        %1229 = vmatpush2.bf16.msra.mxu0 0
        %1230 = vmatprep.subr.bf16.mxu0 0
        %1231 = vmatpush2.bf16.msra.mxu0 0
        %1232 = vmatprep.subr.bf16.mxu0 0
        %1233 = vmatpush2.bf16.msra.mxu0 0
        %1234 = vmatprep.mubr.bf16.mxu0 0
        %1235 = vmatmul.mubr.bf16.gmra.mxu0 %v1197
        %v1236 = vpop.f32.mrf.mxu0
        %v1237 = vadd.f32 0.0, %v1236
        %v1238 = vpop.f32.mrf.mxu0
        %v1239 = vpop.f32.mrf.mxu0
        %v1240 = vpop.f32.mrf.mxu0
        %1241 = vdwg.mxu0
        %1243 = vrot.lane.b32.xlu0 %v1237, 16
        %v1244 = vpop.permute.xlu0 %1243
        %vm1246 = vcmask 195712
        %1247 = vst.msk [vmem:[#allocation3] sm:$0xff] %vm1246, %v1244
        %1248 = vrot.lane.b32.xlu0 %v890, 104
        %v1249 = vpop.permute.xlu0 %1248
        %1250 = vrot.lane.b32.xlu0 %v890, 72
        %v1251 = vpop.permute.xlu0 %1250
        %v1253 = vsel %vm894, %v1249, 0
        %v1256 = vsel %vm894, %v1251, 0
        %1258 = vmatprep.subr.bf16.mxu0 0
        %1259 = vmatpush1.bf16.xpose.msra.mxu0 0
        %1260 = vmatprep.subr.bf16.mxu0 0
        %1261 = vmatpush1.bf16.xpose.msra.mxu0 0
        %1262 = vmatprep.subr.bf16.mxu0 0
        %1263 = vmatpush1.bf16.xpose.msra.mxu0 0
        %1264 = vmatprep.subr.bf16.mxu0 0
        %1265 = vmatpush1.bf16.xpose.msra.mxu0 0
        %1266 = vmatprep.subr.bf16.mxu0 0
        %1267 = vmatpush1.bf16.xpose.msra.mxu0 0
        %1268 = vmatprep.subr.bf16.mxu0 0
        %1269 = vmatpush1.bf16.xpose.msra.mxu0 0
        %1270 = vmatprep.subr.bf16.mxu0 0
        %1271 = vmatpush1.bf16.xpose.msra.mxu0 0
        %1272 = vmatprep.subr.bf16.mxu0 0
        %1273 = vmatpush1.bf16.xpose.msra.mxu0 %v1256
        %1274 = vmatprep.subr.bf16.mxu0 0
        %1275 = vmatpush2.bf16.xpose.msra.mxu0 0
        %1276 = vmatprep.subr.bf16.mxu0 0
        %1277 = vmatpush2.bf16.xpose.msra.mxu0 0
        %1278 = vmatprep.subr.bf16.mxu0 0
        %1279 = vmatpush2.bf16.xpose.msra.mxu0 0
        %1280 = vmatprep.subr.bf16.mxu0 0
        %1281 = vmatpush2.bf16.xpose.msra.mxu0 0
        %1282 = vmatprep.subr.bf16.mxu0 0
        %1283 = vmatpush2.bf16.xpose.msra.mxu0 0
        %1284 = vmatprep.subr.bf16.mxu0 0
        %1285 = vmatpush2.bf16.xpose.msra.mxu0 0
        %1286 = vmatprep.subr.bf16.mxu0 0
        %1287 = vmatpush2.bf16.xpose.msra.mxu0 0
        %1288 = vmatprep.subr.bf16.mxu0 0
        %1289 = vmatpush2.bf16.xpose.msra.mxu0 0
        %1290 = vmatprep.mubr.bf16.mxu0 0
        %1291 = vmatmul.mubr.bf16.gmra.mxu0 %v1253
        %v1292 = vpop.f32.mrf.mxu0
        %v1293 = vadd.f32 0.0, %v1292
        %v1294 = vpop.f32.mrf.mxu0
        %v1295 = vpop.f32.mrf.mxu0
        %v1296 = vpop.f32.mrf.mxu0
        %1297 = vdwg.mxu0
        %v1298 = vmul.f32 %v1293, 0.35355338
        %v1299 = vsel %vm948, -1e+09, %v1298
        %v1300 = vsel %vm894, %v1299, -inf
        %1301 = vmax.xlane.f32.xlu0 %v1300
        %v1302 = vpop.xlane.xlu0 %1301
        %v1303 = vsub.f32 %v1299, %v1302
        %v1304 = vmul.f32 %v1303, 1.442695
        %v1305 = vpow.pop %v1304
        %v1306 = vsel %vm894, %v1305, 0.0
        %1307 = vadd.xlane.f32.xlu0 %v1306
        %v1308 = vpop.xlane.xlu0 %1307
        %v1309 = vrcp.pop %v1308
        %v1310 = vmul.f32 %v1305, %v1309
        %v1311 = vpack.c.bf16 %v1310, %v1310
        %1312 = vrot.lane.b32.xlu0 %v890, 40
        %v1313 = vpop.permute.xlu0 %1312
        %v1315 = vsel %vm894, %v1311, 0
        %v1318 = vsel %vm967, %v1313, 0
        %1320 = vmatprep.subr.bf16.mxu0 0
        %1321 = vmatpush1.bf16.msra.mxu0 0
        %1322 = vmatprep.subr.bf16.mxu0 0
        %1323 = vmatpush1.bf16.msra.mxu0 0
        %1324 = vmatprep.subr.bf16.mxu0 0
        %1325 = vmatpush1.bf16.msra.mxu0 0
        %1326 = vmatprep.subr.bf16.mxu0 0
        %1327 = vmatpush1.bf16.msra.mxu0 0
        %1328 = vmatprep.subr.bf16.mxu0 0
        %1329 = vmatpush1.bf16.msra.mxu0 0
        %1330 = vmatprep.subr.bf16.mxu0 0
        %1331 = vmatpush1.bf16.msra.mxu0 0
        %1332 = vmatprep.subr.bf16.mxu0 0
        %1333 = vmatpush1.bf16.msra.mxu0 0
        %1334 = vmatprep.subr.bf16.mxu0 0
        %1335 = vmatpush1.bf16.msra.mxu0 %v1318
        %1336 = vmatprep.subr.bf16.mxu0 0
        %1337 = vmatpush2.bf16.msra.mxu0 0
        %1338 = vmatprep.subr.bf16.mxu0 0
        %1339 = vmatpush2.bf16.msra.mxu0 0
        %1340 = vmatprep.subr.bf16.mxu0 0
        %1341 = vmatpush2.bf16.msra.mxu0 0
        %1342 = vmatprep.subr.bf16.mxu0 0
        %1343 = vmatpush2.bf16.msra.mxu0 0
        %1344 = vmatprep.subr.bf16.mxu0 0
        %1345 = vmatpush2.bf16.msra.mxu0 0
        %1346 = vmatprep.subr.bf16.mxu0 0
        %1347 = vmatpush2.bf16.msra.mxu0 0
        %1348 = vmatprep.subr.bf16.mxu0 0
        %1349 = vmatpush2.bf16.msra.mxu0 0
        %1350 = vmatprep.subr.bf16.mxu0 0
        %1351 = vmatpush2.bf16.msra.mxu0 0
        %1352 = vmatprep.mubr.bf16.mxu0 0
        %1353 = vmatmul.mubr.bf16.gmra.mxu0 %v1315
        %v1354 = vpop.f32.mrf.mxu0
        %v1355 = vadd.f32 0.0, %v1354
        %v1356 = vpop.f32.mrf.mxu0
        %v1357 = vpop.f32.mrf.mxu0
        %v1358 = vpop.f32.mrf.mxu0
        %1359 = vdwg.mxu0
        %1361 = vrot.lane.b32.xlu0 %v1355, 24
        %v1362 = vpop.permute.xlu0 %1361
        %vm1364 = vcmask 261312
        %1365 = vst.msk [vmem:[#allocation3] sm:$0xff] %vm1364, %v1362
        %v1366 = vld [vmem:[#allocation3] sm:$0xff]
        %v1367 = vpack.c.bf16 %v1366, %v1366
        %v1368 = vld [vmem:[%s749] sm:$0xf]
        %v1369 = vld [vmem:[%s749 + $0x4] sm:$0xf]
        %v1370 = vld [vmem:[%s749 + $0x8] sm:$0xf]
        %v1371 = vld [vmem:[%s749 + $0xc] sm:$0xf]
        %v1372 = vld [vmem:[%s752] sm:$0x1]
        %v1374 = vlaneseq
        %v1375 = vshrl.u32 %v1374, 7
        %v1376 = vsub.s32 0, %v1375
        %v1377 = vrot.slane %v1372, %v1376
        %v1383 = vunpack.c.l.b16 %v1368
        %v1384 = vunpack.c.l.b16 %v1369
        %v1385 = vunpack.c.l.b16 %v1370
        %v1386 = vunpack.c.l.b16 %v1371
        %v1387 = vpack.c.b16 %v1384, %v1383
        %v1388 = vpack.c.b16 %v1386, %v1385
        %v1392 = vsel %vm787, %v1367, 0
        %1394 = vmatprep.subr.bf16.mxu0 0
        %1395 = vmatpush1.bf16.msra.mxu0 0
        %1396 = vmatprep.subr.bf16.mxu0 0
        %1397 = vmatpush1.bf16.msra.mxu0 0
        %1398 = vmatprep.subr.bf16.mxu0 0
        %1399 = vmatpush1.bf16.msra.mxu0 0
        %1400 = vmatprep.subr.bf16.mxu0 0
        %1401 = vmatpush1.bf16.msra.mxu0 0
        %1402 = vmatprep.subr.bf16.mxu0 0
        %1403 = vmatpush1.bf16.msra.mxu0 0
        %1404 = vmatprep.subr.bf16.mxu0 0
        %1405 = vmatpush1.bf16.msra.mxu0 0
        %1406 = vmatprep.subr.bf16.mxu0 0
        %1407 = vmatpush1.bf16.msra.mxu0 %v1388
        %1408 = vmatprep.subr.bf16.mxu0 0
        %1409 = vmatpush1.bf16.msra.mxu0 %v1387
        %1410 = vmatprep.subr.bf16.mxu0 0
        %1411 = vmatpush2.bf16.msra.mxu0 0
        %1412 = vmatprep.subr.bf16.mxu0 0
        %1413 = vmatpush2.bf16.msra.mxu0 0
        %1414 = vmatprep.subr.bf16.mxu0 0
        %1415 = vmatpush2.bf16.msra.mxu0 0
        %1416 = vmatprep.subr.bf16.mxu0 0
        %1417 = vmatpush2.bf16.msra.mxu0 0
        %1418 = vmatprep.subr.bf16.mxu0 0
        %1419 = vmatpush2.bf16.msra.mxu0 0
        %1420 = vmatprep.subr.bf16.mxu0 0
        %1421 = vmatpush2.bf16.msra.mxu0 0
        %1422 = vmatprep.subr.bf16.mxu0 0
        %1423 = vmatpush2.bf16.msra.mxu0 0
        %1424 = vmatprep.subr.bf16.mxu0 0
        %1425 = vmatpush2.bf16.msra.mxu0 0
        %1426 = vmatprep.mubr.bf16.mxu0 0
        %1427 = vmatmul.mubr.bf16.gmra.mxu0 %v1392
        %v1428 = vpop.f32.mrf.mxu0
        %v1429 = vadd.f32 %v1377, %v1428
        %v1430 = vpop.f32.mrf.mxu0
        %v1431 = vpop.f32.mrf.mxu0
        %v1432 = vpop.f32.mrf.mxu0
        %1433 = vdwg.mxu0
        %v1434 = vadd.f32 %v783, %v1429
        %v1435 = vld [vmem:[%s755] sm:$0x1]
        %v1436 = vld [vmem:[%s758] sm:$0x1]
        %v1437 = vsel %vm787, %v1434, 0.0
        %1438 = vadd.xlane.f32.xlu0 %v1437
        %v1439 = vpop.xlane.xlu0 %1438
        %v1440 = vmul.f32 %v1439, %v791
        %v1441 = vsub.f32 %v1434, %v1440
        %v1442 = vmul.f32 %v1441, %v1441
        %v1443 = vsel %vm787, %v1442, 0.0
        %1444 = vadd.xlane.f32.xlu0 %v1443
        %v1445 = vpop.xlane.xlu0 %1444
        %v1446 = vmul.f32 %v1445, 0.032258064
        %v1447 = vrsqrt.pop %v1446
        %v1448 = vmul.f32 %v1446, %v1447
        %vm1449 = vcmp.eq.f32.partialorder %v1446, inf
        %v1450 = vsel %vm1449, %v1446, %v1448
        %vm1451 = vcmp.eq.f32.partialorder %v1446, 0.0
        %v1452 = vand.u32 %v1446, 2147483648
        %v1453 = vsel %vm1451, %v1452, %v1450
        %v1454 = vadd.f32 %v1453, 1e-06
        %v1455 = vrcp.pop %v1454
        %v1456 = vmul.f32 %v1441, %v1455
        %v1458 = vlaneseq
        %v1459 = vshrl.u32 %v1458, 7
        %v1460 = vsub.s32 0, %v1459
        %v1461 = vrot.slane %v1435, %v1460
        %v1463 = vmul.f32 %v1461, %v1456
        %v1465 = vlaneseq
        %v1466 = vshrl.u32 %v1465, 7
        %v1467 = vsub.s32 0, %v1466
        %v1468 = vrot.slane %v1436, %v1467
        %v1470 = vadd.f32 %v1463, %v1468
        %v1471 = vpack.c.bf16 %v1470, %v1470
        %v1472 = vld [vmem:[%s763] sm:$0xf]
        %v1473 = vld [vmem:[%s763 + $0x4] sm:$0xf]
        %v1474 = vld [vmem:[%s763 + $0x8] sm:$0xf]
        %v1475 = vld [vmem:[%s763 + $0xc] sm:$0xf]
        %v1476 = vld [vmem:[%s766] sm:$0x1]
        %v1478 = vlaneseq
        %v1479 = vshrl.u32 %v1478, 7
        %v1480 = vsub.s32 0, %v1479
        %v1481 = vrot.slane %v1476, %v1480
        %v1487 = vunpack.c.l.b16 %v1472
        %v1488 = vunpack.c.l.b16 %v1473
        %v1489 = vunpack.c.l.b16 %v1474
        %v1490 = vunpack.c.l.b16 %v1475
        %v1491 = vpack.c.b16 %v1488, %v1487
        %v1492 = vpack.c.b16 %v1490, %v1489
        %v1496 = vsel %vm787, %v1471, 0
        %1498 = vmatprep.subr.bf16.mxu0 0
        %1499 = vmatpush1.bf16.msra.mxu0 0
        %1500 = vmatprep.subr.bf16.mxu0 0
        %1501 = vmatpush1.bf16.msra.mxu0 0
        %1502 = vmatprep.subr.bf16.mxu0 0
        %1503 = vmatpush1.bf16.msra.mxu0 0
        %1504 = vmatprep.subr.bf16.mxu0 0
        %1505 = vmatpush1.bf16.msra.mxu0 0
        %1506 = vmatprep.subr.bf16.mxu0 0
        %1507 = vmatpush1.bf16.msra.mxu0 0
        %1508 = vmatprep.subr.bf16.mxu0 0
        %1509 = vmatpush1.bf16.msra.mxu0 0
        %1510 = vmatprep.subr.bf16.mxu0 0
        %1511 = vmatpush1.bf16.msra.mxu0 %v1492
        %1512 = vmatprep.subr.bf16.mxu0 0
        %1513 = vmatpush1.bf16.msra.mxu0 %v1491
        %1514 = vmatprep.subr.bf16.mxu0 0
        %1515 = vmatpush2.bf16.msra.mxu0 0
        %1516 = vmatprep.subr.bf16.mxu0 0
        %1517 = vmatpush2.bf16.msra.mxu0 0
        %1518 = vmatprep.subr.bf16.mxu0 0
        %1519 = vmatpush2.bf16.msra.mxu0 0
        %1520 = vmatprep.subr.bf16.mxu0 0
        %1521 = vmatpush2.bf16.msra.mxu0 0
        %1522 = vmatprep.subr.bf16.mxu0 0
        %1523 = vmatpush2.bf16.msra.mxu0 0
        %1524 = vmatprep.subr.bf16.mxu0 0
        %1525 = vmatpush2.bf16.msra.mxu0 0
        %1526 = vmatprep.subr.bf16.mxu0 0
        %1527 = vmatpush2.bf16.msra.mxu0 0
        %1528 = vmatprep.subr.bf16.mxu0 0
        %1529 = vmatpush2.bf16.msra.mxu0 0
        %1530 = vmatprep.mubr.bf16.mxu0 0
        %1531 = vmatmul.mubr.bf16.gmra.mxu0 %v1496
        %v1532 = vpop.f32.mrf.mxu0
        %v1533 = vadd.f32 %v1481, %v1532
        %v1534 = vpop.f32.mrf.mxu0
        %v1535 = vpop.f32.mrf.mxu0
        %v1536 = vpop.f32.mrf.mxu0
        %1537 = vdwg.mxu0
        %v1538 = vmax.f32 %v1533, 0.0
        %v1539 = vpack.c.bf16 %v1538, %v1538
        %v1540 = vld [vmem:[%s771] sm:$0xf]
        %v1541 = vld [vmem:[%s771 + $0x4] sm:$0xf]
        %v1542 = vld [vmem:[%s771 + $0x8] sm:$0xf]
        %v1543 = vld [vmem:[%s771 + $0xc] sm:$0xf]
        %v1544 = vld [vmem:[%s771 + $0x10] sm:$0xf]
        %v1545 = vld [vmem:[%s771 + $0x14] sm:$0xf]
        %v1546 = vld [vmem:[%s771 + $0x18] sm:$0xf]
        %v1547 = vld [vmem:[%s771 + $0x1c] sm:$0xf]
        %v1548 = vld [vmem:[%s774] sm:$0x1]
        %v1550 = vlaneseq
        %v1551 = vshrl.u32 %v1550, 7
        %v1552 = vsub.s32 0, %v1551
        %v1553 = vrot.slane %v1548, %v1552
        %v1563 = vunpack.c.l.b16 %v1540
        %v1564 = vunpack.c.l.b16 %v1541
        %v1565 = vunpack.c.l.b16 %v1542
        %v1566 = vunpack.c.l.b16 %v1543
        %v1567 = vunpack.c.l.b16 %v1544
        %v1568 = vunpack.c.l.b16 %v1545
        %v1569 = vunpack.c.l.b16 %v1546
        %v1570 = vunpack.c.l.b16 %v1547
        %v1571 = vpack.c.b16 %v1564, %v1563
        %v1572 = vpack.c.b16 %v1566, %v1565
        %v1573 = vpack.c.b16 %v1568, %v1567
        %v1574 = vpack.c.b16 %v1570, %v1569
        %vm1579 = vcmask 523264
        %v1581 = vsel %vm1579, %v1539, 0
        %1583 = vmatprep.subr.bf16.mxu0 0
        %1584 = vmatpush1.bf16.msra.mxu0 0
        %1585 = vmatprep.subr.bf16.mxu0 0
        %1586 = vmatpush1.bf16.msra.mxu0 0
        %1587 = vmatprep.subr.bf16.mxu0 0
        %1588 = vmatpush1.bf16.msra.mxu0 0
        %1589 = vmatprep.subr.bf16.mxu0 0
        %1590 = vmatpush1.bf16.msra.mxu0 0
        %1591 = vmatprep.subr.bf16.mxu0 0
        %1592 = vmatpush1.bf16.msra.mxu0 %v1574
        %1593 = vmatprep.subr.bf16.mxu0 0
        %1594 = vmatpush1.bf16.msra.mxu0 %v1573
        %1595 = vmatprep.subr.bf16.mxu0 0
        %1596 = vmatpush1.bf16.msra.mxu0 %v1572
        %1597 = vmatprep.subr.bf16.mxu0 0
        %1598 = vmatpush1.bf16.msra.mxu0 %v1571
        %1599 = vmatprep.subr.bf16.mxu0 0
        %1600 = vmatpush2.bf16.msra.mxu0 0
        %1601 = vmatprep.subr.bf16.mxu0 0
        %1602 = vmatpush2.bf16.msra.mxu0 0
        %1603 = vmatprep.subr.bf16.mxu0 0
        %1604 = vmatpush2.bf16.msra.mxu0 0
        %1605 = vmatprep.subr.bf16.mxu0 0
        %1606 = vmatpush2.bf16.msra.mxu0 0
        %1607 = vmatprep.subr.bf16.mxu0 0
        %1608 = vmatpush2.bf16.msra.mxu0 0
        %1609 = vmatprep.subr.bf16.mxu0 0
        %1610 = vmatpush2.bf16.msra.mxu0 0
        %1611 = vmatprep.subr.bf16.mxu0 0
        %1612 = vmatpush2.bf16.msra.mxu0 0
        %1613 = vmatprep.subr.bf16.mxu0 0
        %1614 = vmatpush2.bf16.msra.mxu0 0
        %1615 = vmatprep.mubr.bf16.mxu0 0
        %1616 = vmatmul.mubr.bf16.gmra.mxu0 %v1581
        %v1617 = vpop.f32.mrf.mxu0
        %v1618 = vadd.f32 %v1553, %v1617
        %v1619 = vpop.f32.mrf.mxu0
        %v1620 = vpop.f32.mrf.mxu0
        %v1621 = vpop.f32.mrf.mxu0
        %1622 = vdwg.mxu0
        %v1623 = vadd.f32 %v1434, %v1618
        %1624 = vst.msk [vmem:[#allocation2] sm:$0xff] %vm787, %v1623
        %p1625 = scmp.eq.s32.totalorder %s41, 1
        // Predicated region
        $region97: #{tpu_custom_call.1} parent=83 // pred_check
          %p1626 = pneg %p1625
        $region98: #{tpu_custom_call.1} parent=83 // pred_check_branch
          %1628 = sbr.rel (%p1626) target = $region100
        $region99: #{tpu_custom_call.1} parent=83 // pred_region
          %v1629 = vld [vmem:[%s14] sm:$0x1]
          %v1630 = vld [vmem:[%s15] sm:$0x1]
          %v1631 = vsel %vm787, %v1623, 0.0
          %1632 = vadd.xlane.f32.xlu0 %v1631
          %v1633 = vpop.xlane.xlu0 %1632
          %v1634 = vmul.f32 %v1633, %v791
          %v1635 = vsub.f32 %v1623, %v1634
          %v1636 = vmul.f32 %v1635, %v1635
          %v1637 = vsel %vm787, %v1636, 0.0
          %1638 = vadd.xlane.f32.xlu0 %v1637
          %v1639 = vpop.xlane.xlu0 %1638
          %v1640 = vmul.f32 %v1639, 0.032258064
          %v1641 = vrsqrt.pop %v1640
          %v1642 = vmul.f32 %v1640, %v1641
          %vm1643 = vcmp.eq.f32.partialorder %v1640, inf
          %v1644 = vsel %vm1643, %v1640, %v1642
          %vm1645 = vcmp.eq.f32.partialorder %v1640, 0.0
          %v1646 = vand.u32 %v1640, 2147483648
          %v1647 = vsel %vm1645, %v1646, %v1644
          %v1648 = vadd.f32 %v1647, 1e-06
          %v1649 = vrcp.pop %v1648
          %v1650 = vmul.f32 %v1635, %v1649
          %v1652 = vlaneseq
          %v1653 = vshrl.u32 %v1652, 7
          %v1654 = vsub.s32 0, %v1653
          %v1655 = vrot.slane %v1629, %v1654
          %v1657 = vmul.f32 %v1655, %v1650
          %v1659 = vlaneseq
          %v1660 = vshrl.u32 %v1659, 7
          %v1661 = vsub.s32 0, %v1660
          %v1662 = vrot.slane %v1630, %v1661
          %v1664 = vadd.f32 %v1657, %v1662
          %1665 = vst.msk [vmem:[%s730] sm:$0xff] %vm787, %v1664
        $region100: #{tpu_custom_call.1} parent=83 // pred_fallthru
          _
        %s1666 = sand.u32 %s462, 1
        %s1667 = scalar_lea.sflag [#allocation6], %s1666
        %s1668 = sand.u32 %s462, 1
        %s1669 = smul.addr %s1668, 8
        %s1670 = scalar_lea.vmem [#allocation9], %s1669
        // Predicated region
        $region101: #{tpu_custom_call.1} parent=83 // pred_check
          %p1671 = pneg %p472
        $region102: #{tpu_custom_call.1} parent=83 // pred_check_branch
          %1673 = sbr.rel (%p1671) target = $region104
        $region103: #{tpu_custom_call.1} parent=83 // pred_region
          %s1675 = ssub.s32 128, 128
          %1676 = vsyncadd %s1667, %s1675
          %s1677 = smul.addr %s40, 128
          %s1678 = scalar_lea.hbm %s16, %s1677
          %s1680 = sshll.u32 %s1670, 4
          %s1681 = int_to_ptr.vmem [resolvable:$true] %s1680
          %1683 = dma.vmem_to_hbm [thread:$0]  %s1681, 128, %s1678, %s1667
        $region104: #{tpu_custom_call.1} parent=83 // pred_fallthru
          _
      $region84: #{tpu_custom_call.1} parent=5 // pred_fallthru
        _
      %p1684 = scmp.le.s32.totalorder 2, %s31
      // Predicated region
      $region105: #{tpu_custom_call.1} parent=5 // pred_check
        %p1685 = pneg %p1684
      $region106: #{tpu_custom_call.1} parent=5 // pred_check_branch
        %1687 = sbr.rel (%p1685) target = $region108
      $region107: #{tpu_custom_call.1} parent=5 // pred_region
        %s1688 = ssub.s32 %s31, 2
        // Predicated region
        $region109: #{tpu_custom_call.1} parent=107 // pred_check
          %p1689 = pneg %p478
        $region110: #{tpu_custom_call.1} parent=107 // pred_check_branch
          %1691 = sbr.rel (%p1689) target = $region112
        $region111: #{tpu_custom_call.1} parent=107 // pred_region
          %s1692 = sand.u32 %s463, 1
          %s1693 = scalar_lea.sflag [#allocation6], %s1692
          %s1694 = sand.u32 %s463, 1
          %s1695 = smul.addr %s1694, 8
          %s1696 = scalar_lea.vmem [#allocation9], %s1695
          %1697 = dma.done %s1693, 128
        $region112: #{tpu_custom_call.1} parent=107 // pred_fallthru
          _
      $region108: #{tpu_custom_call.1} parent=5 // pred_fallthru
        _
    $region6: #{tpu_custom_call.1} parent=1 // loop_footer
      %s35 = sadd.s32 1, %s31
    $region7: #{tpu_custom_call.1} parent=1 // loop_footer_branch
      %30 = sbr.rel target = $region3
    $region8: #{tpu_custom_call.1} parent=1 // loop_exit
      _
    %1698 = vsyncpa [#allocation5], 1
    %s1699 = scalar_lea.sflag [#allocation5], 1
    %1700 = vsyncpa %s1699, 1
    %1701 = vsyncpa [#allocation8], 1
    %s1702 = scalar_lea.sflag [#allocation8], 1
    %1703 = vsyncpa %s1702, 1
    %1704 = vsyncpa [#allocation6], 1
    %s1705 = scalar_lea.sflag [#allocation6], 1
    %1706 = vsyncpa %s1705, 1

</llo_original>
